<compile_context>
chip_gen: v6e
topology: v6e:2x2x1
jax: 0.10.0
libtpu: 0.0.40
codegen_flags: <defaults>
</compile_context>

<pallas_src>
import math

import jax
import jax.numpy as jnp
from jax import lax
from jax.experimental import pallas as pl
from jax.experimental.pallas import tpu as pltpu

# Small, self-consistent toy shapes (emb_dim -> D).
B, S, D, H, F, V = 2, 8, 32, 4, 128, 64
DH = D // H
BS = B * S
NEG = -1.0e9
LANES = 128

assert D % H == 0
assert 3 * D <= LANES          # fused q/k/v bias fits one lane-padded slab row
assert F <= LANES              # b1 fits one slab row (sliced [0:F] explicitly)
assert D + BS <= LANES         # [aggregate | CLS attention] fits one small row


def _layernorm(x, g, b, eps=1e-5):
    mu = jnp.mean(x, axis=-1, keepdims=True)
    var = jnp.mean((x - mu) ** 2, axis=-1, keepdims=True)
    return (x - mu) * lax.rsqrt(var + eps) * g + b


def _gelu(x):
    # gelu_new / tanh approximation (GPT2 flavour).
    # TODO(synk): HF BERT uses exact erf GELU; swap if the backbone is BERT.
    c = math.sqrt(2.0 / math.pi)
    return 0.5 * x * (1.0 + jnp.tanh(c * (x + 0.044715 * x * x * x)))


def encoder_kernel(x_ref, add_mask_ref, pool_ref, cls_ref,
                   wqkv_ref, wo_ref, w1_ref, w2_ref, vec_ref,
                   hidden_ref, small_ref):
    x = x_ref[...]                    # (BS, D) f32 token states, batch on sublanes
    add_mask = add_mask_ref[...]      # (BS, BS) block-diagonal additive mask
    pool = pool_ref[...]              # (B, BS)  mask/count pooling matrix (exact divide)
    cls_sel = cls_ref[...]            # (B, BS)  one-hot CLS-row selector

    # ---- unpack the lane-padded bias / LayerNorm slab (one vector per row) ----
    bqkv = vec_ref[0:1, 0:3 * D]      # fused q|k|v bias
    bo   = vec_ref[1:2, 0:D]
    g1   = vec_ref[2:3, 0:D]
    be1  = vec_ref[3:4, 0:D]
    b1   = vec_ref[4:5, 0:F]
    b2   = vec_ref[5:6, 0:D]
    g2   = vec_ref[6:7, 0:D]
    be2  = vec_ref[7:8, 0:D]

    # ---- fused QKV projection: one (BS,D)@(D,3D) bf16 matmul, f32 accumulate ----
    qkv = jnp.dot(x.astype(jnp.bfloat16), wqkv_ref[...],
                  preferred_element_type=jnp.float32) + bqkv          # (BS, 3D) f32

    # ---- per-head attention over the folded (B*S) key axis ----
    # Head views are static lane slices of the fused QKV result (no reshapes /
    # transposes); H=4 unrolled — the MXU serializes per-head matmuls anyway.
    scale = 1.0 / math.sqrt(DH)
    p_sum = jnp.zeros((BS, BS), jnp.float32)
    ctx_parts = []
    for h in range(H):
        lo = h * DH
        qh = qkv[:, lo:lo + DH].astype(jnp.bfloat16)
        kh = qkv[:, D + lo:D + lo + DH].astype(jnp.bfloat16)
        vh = qkv[:, 2 * D + lo:2 * D + lo + DH].astype(jnp.bfloat16)
        s = jnp.einsum('qd,kd->qk', qh, kh,
                       preferred_element_type=jnp.float32) * scale + add_mask
        s = s - jnp.max(s, axis=-1, keepdims=True)
        e = jnp.exp(s)
        # approx EUP reciprocal only for softmax; pooling divide is exact (wrapper).
        p = e * pl.reciprocal(jnp.sum(e, axis=-1, keepdims=True), approx=True)
        p_sum = p_sum + p
        ctx_parts.append(jnp.dot(p.astype(jnp.bfloat16), vh,
                                 preferred_element_type=jnp.float32))  # (BS, DH)
    ctx = jnp.concatenate(ctx_parts, axis=1)                           # (BS, D)

    # ---- merge heads through ONE output-projection matmul + residual + LN ----
    attn_out = jnp.dot(ctx.astype(jnp.bfloat16), wo_ref[...],
                       preferred_element_type=jnp.float32) + bo        # (BS, D)
    h1 = _layernorm(x + attn_out, g1, be1)

    # ---- feed forward (bf16 matmuls, f32 vector math) ----
    ff = _gelu(jnp.dot(h1.astype(jnp.bfloat16), w1_ref[...],
                       preferred_element_type=jnp.float32) + b1)
    ff = jnp.dot(ff.astype(jnp.bfloat16), w2_ref[...],
                 preferred_element_type=jnp.float32) + b2
    h2 = _layernorm(h1 + ff, g2, be2)

    # Lane-dense hidden output: one unmasked (BS,128) store; wrapper slices [:, :D].
    hidden_ref[...] = jnp.concatenate(
        [h2, jnp.zeros((BS, LANES - D), jnp.float32)], axis=1)

    # ---- small outputs ----
    # aggregate = (mask/count) @ h2  (exact divide baked into `pool` by wrapper);
    # all-zero attention-mask rows yield inf/NaN, matching the reference module.
    agg = jnp.dot(pool, h2, preferred_element_type=jnp.float32)        # (B, D)
    # head-mean CLS attention rows selected with a one-hot matmul.
    attn_rows = jnp.dot(cls_sel, p_sum * (1.0 / H),
                        preferred_element_type=jnp.float32)            # (B, BS)
    small_ref[...] = jnp.zeros_like(small_ref)
    small_ref[:, 0:D] = agg
    small_ref[:, D:D + BS] = attn_rows


def _prep_weights(params):
    """Wrapper-side packing: fused bf16 QKV slab, bf16 matmul weights, and one
    lane-padded (8,128) f32 slab holding every bias / LayerNorm vector."""
    wqkv = jnp.concatenate([params['wq'], params['wk'], params['wv']],
                           axis=1).astype(jnp.bfloat16)                # (D, 3D)
    wo = params['wo'].astype(jnp.bfloat16)                             # (D, D)
    w1 = params['w1'].astype(jnp.bfloat16)                             # (D, F)
    w2 = params['w2'].astype(jnp.bfloat16)                             # (F, D)

    bqkv = jnp.concatenate([params['bq'], params['bk'], params['bv']])  # (3D,)
    rows = (bqkv, params['bo'], params['g1'], params['be1'],
            params['b1'], params['b2'], params['g2'], params['be2'])
    vec = jnp.stack([jnp.pad(v, (0, LANES - v.shape[0])) for v in rows])  # (8, 128)
    return wqkv, wo, w1, w2, vec


def _prep_masks(maskf):
    """Precompute the block-diagonal attention mask, the exact-divide pooling
    matrix and the CLS-row selector in the wrapper (tiny XLA ops, one DMA each)."""
    key_flat = maskf.reshape(1, BS)                                     # (1, BS)
    col_batch = (jnp.arange(BS) // S)[None, :]                          # (1, BS)
    qb = jnp.arange(BS)[:, None] // S                                   # (BS, 1)
    attend = jnp.where(qb == col_batch, key_flat, 0.0)                  # (BS, BS)
    add_mask = (1.0 - attend) * NEG

    count = jnp.sum(maskf, axis=1, keepdims=True)                       # (B, 1)
    pool = jnp.where(jnp.arange(B)[:, None] == col_batch, key_flat, 0.0)  # (B, BS)
    pool = pool / count            # exact division; zero-count rows -> inf/NaN (ref behaviour)

    cls_sel = jnp.zeros((B, BS), jnp.float32)
    cls_sel = cls_sel.at[jnp.arange(B), jnp.arange(B) * S].set(1.0)     # (B, BS)
    return add_mask, pool, cls_sel


def _run_encoder(x_flat, add_mask, pool, cls_sel, weights):
    inputs = (x_flat, add_mask, pool, cls_sel) + weights
    out_shape = (jax.ShapeDtypeStruct((BS, LANES), jnp.float32),    # [hidden | 0] slab
                 jax.ShapeDtypeStruct((B, LANES), jnp.float32))     # [agg | cls-attn | 0]
    out_specs = (pl.BlockSpec((BS, LANES), lambda i: (0, 0)),
                 pl.BlockSpec((B, LANES), lambda i: (0, 0)))
    return pl.pallas_call(
        encoder_kernel,
        out_shape=out_shape,
        grid=(1,),                                   # single step at toy shapes
        in_specs=[pl.BlockSpec(a.shape, lambda i: (0, 0)) for a in inputs],
        out_specs=out_specs,
        compiler_params=pltpu.CompilerParams(
            dimension_semantics=("arbitrary",)),
    )(*inputs)


def init_params(key):
    ks = jax.random.split(key, 8)
    s = 0.02
    return {
        'tok_emb': jax.random.normal(ks[0], (V, D), jnp.float32) * s,
        'pos_emb': jax.random.normal(ks[1], (S, D), jnp.float32) * s,
        'ln0_g': jnp.ones((D,), jnp.float32),
        'ln0_b': jnp.zeros((D,), jnp.float32),
        'wq': jax.random.normal(ks[2], (D, D), jnp.float32) * s,
        'bq': jnp.zeros((D,), jnp.float32),
        'wk': jax.random.normal(ks[3], (D, D), jnp.float32) * s,
        'bk': jnp.zeros((D,), jnp.float32),
        'wv': jax.random.normal(ks[4], (D, D), jnp.float32) * s,
        'bv': jnp.zeros((D,), jnp.float32),
        'wo': jax.random.normal(ks[5], (D, D), jnp.float32) * s,
        'bo': jnp.zeros((D,), jnp.float32),
        'g1': jnp.ones((D,), jnp.float32),
        'be1': jnp.zeros((D,), jnp.float32),
        'w1': jax.random.normal(ks[6], (D, F), jnp.float32) * s,
        'b1': jnp.zeros((F,), jnp.float32),
        'w2': jax.random.normal(ks[7], (F, D), jnp.float32) * s,
        'b2': jnp.zeros((D,), jnp.float32),
        'g2': jnp.ones((D,), jnp.float32),
        'be2': jnp.zeros((D,), jnp.float32),
    }


def language_encoder_forward(params, input_ids, attention_mask):
    """Mirrors LanguageEncoder.forward with a 1-layer synthetic backbone."""
    maskf = attention_mask.astype(jnp.float32)

    # Embedding lookup + embedding LayerNorm (gather + elementwise glue in JAX).
    # TODO(synk): could fold into the kernel via scalar-prefetched ids + pl.Element
    # row gather if this op sits in a hot loop.
    x = params['tok_emb'][input_ids] + params['pos_emb'][None, :, :]
    x = _layernorm(x, params['ln0_g'], params['ln0_b'])
    x_flat = x.reshape(BS, D)

    add_mask, pool, cls_sel = _prep_masks(maskf)
    hidden_pad, small = _run_encoder(x_flat, add_mask, pool, cls_sel,
                                     _prep_weights(params))

    hidden = hidden_pad[:, :D].reshape(B, S, D)        # last_hidden_state
    aggregate = small[:, :D]                           # (B, D) masked mean-pooled features
    attn_rows = small[:, D:D + BS]                     # (B, B*S) head-mean CLS attention
    attn_cls = attn_rows.reshape(B, B, S)[jnp.arange(B), jnp.arange(B)]   # (B, S)

    # num_layers == 1 -> features == last hidden state; embedded is the
    # elementwise mask multiply done outside the backbone (as in PyTorch).
    embedded = hidden * maskf[:, :, None]
    last_layer_attn = attn_cls[:, 1:]                  # drop the CLS->CLS column

    # TODO(synk): aggregate_tokens() merges '##' wordpieces using the HF
    # tokenizer's string vocab; with no tokenizer it is treated as identity,
    # so report/word features are the CLS / non-CLS rows of the last hidden
    # state and last_attn passes through unchanged.
    report_feat = hidden[:, 0]                         # (B, D)
    word_feat = hidden[:, 1:]                          # (B, S-1, D)

    encoded_layers = (hidden,)
    return {
        'aggregate': aggregate,
        'embedded': embedded,
        'masks': attention_mask,
        'hidden': encoded_layers[-1],
        'all_hidden': encoded_layers,
        'report': report_feat,
        'word': word_feat,
        'last_attn': last_layer_attn,
    }


if __name__ == "__main__":
    key = jax.random.PRNGKey(0)
    pkey, ikey = jax.random.split(key)
    params = init_params(pkey)

    input_ids = jax.random.randint(ikey, (B, S), 0, V, dtype=jnp.int32)
    attention_mask = jnp.array(
        [[1, 1, 1, 1, 1, 1, 1, 1],
         [1, 1, 1, 1, 1, 1, 0, 0]], dtype=jnp.int32)

    out = language_encoder_forward(params, input_ids, attention_mask)
    jax.block_until_ready(out)

    assert out['aggregate'].shape == (B, D)
    assert out['embedded'].shape == (B, S, D)
    assert out['hidden'].shape == (B, S, D)
    assert out['report'].shape == (B, D)
    assert out['word'].shape == (B, S - 1, D)
    assert out['last_attn'].shape == (B, S - 1)
    assert bool(jnp.all(jnp.isfinite(out['aggregate'])))
    assert bool(jnp.all(jnp.isfinite(out['hidden'])))
    print("KERNEL_OK")
</pallas_src>

<mosaic_0001>
module attributes {stable_mosaic.version = 11 : i64} {
  func.func @encoder_kernel(%arg0: i32, %arg1: memref<16x32xf32, #tpu.memory_space<vmem>>, %arg2: memref<16x16xf32, #tpu.memory_space<vmem>>, %arg3: memref<2x16xf32, #tpu.memory_space<vmem>>, %arg4: memref<2x16xf32, #tpu.memory_space<vmem>>, %arg5: memref<32x96xbf16, #tpu.memory_space<vmem>>, %arg6: memref<32x32xbf16, #tpu.memory_space<vmem>>, %arg7: memref<32x128xbf16, #tpu.memory_space<vmem>>, %arg8: memref<128x32xbf16, #tpu.memory_space<vmem>>, %arg9: memref<8x128xf32, #tpu.memory_space<vmem>>, %arg10: memref<16x128xf32, #tpu.memory_space<vmem>>, %arg11: memref<2x128xf32, #tpu.memory_space<vmem>>) attributes {dimension_semantics = [#tpu.dimension_semantics<arbitrary>], iteration_bounds = array<i64: 1>, scalar_prefetch = 0 : i64, scratch_operands = 0 : i64, tpu.core_type = #tpu.core_type<tc>, window_params = [{pipeline_mode = #tpu.pipeline_mode<synchronous>, transform_indices = @transform_0, window_bounds = array<i64: 16, 32>}, {pipeline_mode = #tpu.pipeline_mode<synchronous>, transform_indices = @transform_1, window_bounds = array<i64: 16, 16>}, {pipeline_mode = #tpu.pipeline_mode<synchronous>, transform_indices = @transform_2, window_bounds = array<i64: 2, 16>}, {pipeline_mode = #tpu.pipeline_mode<synchronous>, transform_indices = @transform_3, window_bounds = array<i64: 2, 16>}, {pipeline_mode = #tpu.pipeline_mode<synchronous>, transform_indices = @transform_4, window_bounds = array<i64: 32, 96>}, {pipeline_mode = #tpu.pipeline_mode<synchronous>, transform_indices = @transform_5, window_bounds = array<i64: 32, 32>}, {pipeline_mode = #tpu.pipeline_mode<synchronous>, transform_indices = @transform_6, window_bounds = array<i64: 32, 128>}, {pipeline_mode = #tpu.pipeline_mode<synchronous>, transform_indices = @transform_7, window_bounds = array<i64: 128, 32>}, {pipeline_mode = #tpu.pipeline_mode<synchronous>, transform_indices = @transform_8, window_bounds = array<i64: 8, 128>}, {pipeline_mode = #tpu.pipeline_mode<synchronous>, transform_indices = @transform_9, window_bounds = array<i64: 16, 128>}, {pipeline_mode = #tpu.pipeline_mode<synchronous>, transform_indices = @transform_10, window_bounds = array<i64: 2, 128>}]} {
    %c0 = arith.constant 0 : index
    %c0_0 = arith.constant 0 : index
    %0 = vector.load %arg1[%c0, %c0_0] : memref<16x32xf32, #tpu.memory_space<vmem>>, vector<16x32xf32>
    %c0_1 = arith.constant 0 : index
    %c0_2 = arith.constant 0 : index
    %1 = vector.load %arg2[%c0_1, %c0_2] : memref<16x16xf32, #tpu.memory_space<vmem>>, vector<16x16xf32>
    %c0_3 = arith.constant 0 : index
    %c0_4 = arith.constant 0 : index
    %2 = vector.load %arg3[%c0_3, %c0_4] : memref<2x16xf32, #tpu.memory_space<vmem>>, vector<2x16xf32>
    %c0_5 = arith.constant 0 : index
    %c0_6 = arith.constant 0 : index
    %3 = vector.load %arg4[%c0_5, %c0_6] : memref<2x16xf32, #tpu.memory_space<vmem>>, vector<2x16xf32>
    %c0_7 = arith.constant 0 : index
    %c0_8 = arith.constant 0 : index
    %4 = vector.load %arg9[%c0_7, %c0_8] : memref<8x128xf32, #tpu.memory_space<vmem>>, vector<1x96xf32>
    %c1 = arith.constant 1 : index
    %c0_9 = arith.constant 0 : index
    %5 = vector.load %arg9[%c1, %c0_9] : memref<8x128xf32, #tpu.memory_space<vmem>>, vector<1x32xf32>
    %c2 = arith.constant 2 : index
    %c0_10 = arith.constant 0 : index
    %6 = vector.load %arg9[%c2, %c0_10] : memref<8x128xf32, #tpu.memory_space<vmem>>, vector<1x32xf32>
    %c3 = arith.constant 3 : index
    %c0_11 = arith.constant 0 : index
    %7 = vector.load %arg9[%c3, %c0_11] : memref<8x128xf32, #tpu.memory_space<vmem>>, vector<1x32xf32>
    %c4 = arith.constant 4 : index
    %c0_12 = arith.constant 0 : index
    %8 = vector.load %arg9[%c4, %c0_12] : memref<8x128xf32, #tpu.memory_space<vmem>>, vector<1x128xf32>
    %c5 = arith.constant 5 : index
    %c0_13 = arith.constant 0 : index
    %9 = vector.load %arg9[%c5, %c0_13] : memref<8x128xf32, #tpu.memory_space<vmem>>, vector<1x32xf32>
    %c6 = arith.constant 6 : index
    %c0_14 = arith.constant 0 : index
    %10 = vector.load %arg9[%c6, %c0_14] : memref<8x128xf32, #tpu.memory_space<vmem>>, vector<1x32xf32>
    %c7 = arith.constant 7 : index
    %c0_15 = arith.constant 0 : index
    %11 = vector.load %arg9[%c7, %c0_15] : memref<8x128xf32, #tpu.memory_space<vmem>>, vector<1x32xf32>
    %12 = arith.truncf %0 : vector<16x32xf32> to vector<16x32xbf16>
    %c0_16 = arith.constant 0 : index
    %c0_17 = arith.constant 0 : index
    %13 = vector.load %arg5[%c0_16, %c0_17] : memref<32x96xbf16, #tpu.memory_space<vmem>>, vector<32x96xbf16>
    %cst = arith.constant dense<0.000000e+00> : vector<16x96xf32>
    %14 = tpu.matmul %12, %13, %cst {dimension_numbers = #tpu.dot_dimension_numbers<[1], [0], [0], [1], [0, 0, 1, 1], [], []>} : vector<16x32xbf16>, vector<32x96xbf16>, vector<16x96xf32> -> vector<16x96xf32>
    %15 = vector.broadcast %4 : vector<1x96xf32> to vector<16x96xf32>
    %16 = arith.addf %14, %15 : vector<16x96xf32>
    %cst_18 = arith.constant 0.000000e+00 : f32
    %17 = vector.broadcast %cst_18 : f32 to vector<16x16xf32>
    %18 = vector.extract_strided_slice %16 {offsets = [0, 0], sizes = [16, 8], strides = [1, 1]} : vector<16x96xf32> to vector<16x8xf32>
    %19 = arith.truncf %18 : vector<16x8xf32> to vector<16x8xbf16>
    %20 = vector.extract_strided_slice %16 {offsets = [0, 32], sizes = [16, 8], strides = [1, 1]} : vector<16x96xf32> to vector<16x8xf32>
    %21 = arith.truncf %20 : vector<16x8xf32> to vector<16x8xbf16>
    %22 = vector.extract_strided_slice %16 {offsets = [0, 64], sizes = [16, 8], strides = [1, 1]} : vector<16x96xf32> to vector<16x8xf32>
    %23 = arith.truncf %22 : vector<16x8xf32> to vector<16x8xbf16>
    "tpu.trace_start"() <{level = 10 : i32, message = "qd,kd->qk"}> : () -> ()
    %cst_19 = arith.constant dense<0.000000e+00> : vector<16x16xf32>
    %24 = tpu.matmul %19, %21, %cst_19 {dimension_numbers = #tpu.dot_dimension_numbers<[1], [1], [0], [0], [0, 0, 1, 0], [], []>} : vector<16x8xbf16>, vector<16x8xbf16>, vector<16x16xf32> -> vector<16x16xf32>
    "tpu.trace_stop"() : () -> ()
    %cst_20 = arith.constant 0.353553385 : f32
    %25 = vector.broadcast %cst_20 : f32 to vector<16x16xf32>
    %26 = arith.mulf %24, %25 : vector<16x16xf32>
    %27 = arith.addf %26, %1 : vector<16x16xf32>
    %cst_21 = arith.constant dense<0xFF800000> : vector<16xf32>
    %28 = vector.multi_reduction <maximumf>, %27, %cst_21 [1] : vector<16x16xf32> to vector<16xf32>
    %29 = vector.shape_cast %28 : vector<16xf32> to vector<16x1xf32>
    %30 = vector.broadcast %29 : vector<16x1xf32> to vector<16x16xf32>
    %31 = arith.subf %27, %30 : vector<16x16xf32>
    %32 = math.exp %31 : vector<16x16xf32>
    %cst_22 = arith.constant dense<0.000000e+00> : vector<16xf32>
    %33 = vector.multi_reduction <add>, %32, %cst_22 [1] : vector<16x16xf32> to vector<16xf32>
    %34 = vector.shape_cast %33 : vector<16xf32> to vector<16x1xf32>
    %35 = tpu.reciprocal %34 {approx = true} : vector<16x1xf32> -> vector<16x1xf32>
    %36 = vector.broadcast %35 : vector<16x1xf32> to vector<16x16xf32>
    %37 = arith.mulf %32, %36 : vector<16x16xf32>
    %38 = arith.addf %17, %37 : vector<16x16xf32>
    %39 = arith.truncf %37 : vector<16x16xf32> to vector<16x16xbf16>
    %cst_23 = arith.constant dense<0.000000e+00> : vector<16x8xf32>
    %40 = tpu.matmul %39, %23, %cst_23 {dimension_numbers = #tpu.dot_dimension_numbers<[1], [0], [0], [1], [0, 0, 1, 1], [], []>} : vector<16x16xbf16>, vector<16x8xbf16>, vector<16x8xf32> -> vector<16x8xf32>
    %41 = vector.extract_strided_slice %16 {offsets = [0, 8], sizes = [16, 8], strides = [1, 1]} : vector<16x96xf32> to vector<16x8xf32>
    %42 = arith.truncf %41 : vector<16x8xf32> to vector<16x8xbf16>
    %43 = vector.extract_strided_slice %16 {offsets = [0, 40], sizes = [16, 8], strides = [1, 1]} : vector<16x96xf32> to vector<16x8xf32>
    %44 = arith.truncf %43 : vector<16x8xf32> to vector<16x8xbf16>
    %45 = vector.extract_strided_slice %16 {offsets = [0, 72], sizes = [16, 8], strides = [1, 1]} : vector<16x96xf32> to vector<16x8xf32>
    %46 = arith.truncf %45 : vector<16x8xf32> to vector<16x8xbf16>
    "tpu.trace_start"() <{level = 10 : i32, message = "qd,kd->qk"}> : () -> ()
    %cst_24 = arith.constant dense<0.000000e+00> : vector<16x16xf32>
    %47 = tpu.matmul %42, %44, %cst_24 {dimension_numbers = #tpu.dot_dimension_numbers<[1], [1], [0], [0], [0, 0, 1, 0], [], []>} : vector<16x8xbf16>, vector<16x8xbf16>, vector<16x16xf32> -> vector<16x16xf32>
    "tpu.trace_stop"() : () -> ()
    %cst_25 = arith.constant 0.353553385 : f32
    %48 = vector.broadcast %cst_25 : f32 to vector<16x16xf32>
    %49 = arith.mulf %47, %48 : vector<16x16xf32>
    %50 = arith.addf %49, %1 : vector<16x16xf32>
    %cst_26 = arith.constant dense<0xFF800000> : vector<16xf32>
    %51 = vector.multi_reduction <maximumf>, %50, %cst_26 [1] : vector<16x16xf32> to vector<16xf32>
    %52 = vector.shape_cast %51 : vector<16xf32> to vector<16x1xf32>
    %53 = vector.broadcast %52 : vector<16x1xf32> to vector<16x16xf32>
    %54 = arith.subf %50, %53 : vector<16x16xf32>
    %55 = math.exp %54 : vector<16x16xf32>
    %cst_27 = arith.constant dense<0.000000e+00> : vector<16xf32>
    %56 = vector.multi_reduction <add>, %55, %cst_27 [1] : vector<16x16xf32> to vector<16xf32>
    %57 = vector.shape_cast %56 : vector<16xf32> to vector<16x1xf32>
    %58 = tpu.reciprocal %57 {approx = true} : vector<16x1xf32> -> vector<16x1xf32>
    %59 = vector.broadcast %58 : vector<16x1xf32> to vector<16x16xf32>
    %60 = arith.mulf %55, %59 : vector<16x16xf32>
    %61 = arith.addf %38, %60 : vector<16x16xf32>
    %62 = arith.truncf %60 : vector<16x16xf32> to vector<16x16xbf16>
    %cst_28 = arith.constant dense<0.000000e+00> : vector<16x8xf32>
    %63 = tpu.matmul %62, %46, %cst_28 {dimension_numbers = #tpu.dot_dimension_numbers<[1], [0], [0], [1], [0, 0, 1, 1], [], []>} : vector<16x16xbf16>, vector<16x8xbf16>, vector<16x8xf32> -> vector<16x8xf32>
    %64 = vector.extract_strided_slice %16 {offsets = [0, 16], sizes = [16, 8], strides = [1, 1]} : vector<16x96xf32> to vector<16x8xf32>
    %65 = arith.truncf %64 : vector<16x8xf32> to vector<16x8xbf16>
    %66 = vector.extract_strided_slice %16 {offsets = [0, 48], sizes = [16, 8], strides = [1, 1]} : vector<16x96xf32> to vector<16x8xf32>
    %67 = arith.truncf %66 : vector<16x8xf32> to vector<16x8xbf16>
    %68 = vector.extract_strided_slice %16 {offsets = [0, 80], sizes = [16, 8], strides = [1, 1]} : vector<16x96xf32> to vector<16x8xf32>
    %69 = arith.truncf %68 : vector<16x8xf32> to vector<16x8xbf16>
    "tpu.trace_start"() <{level = 10 : i32, message = "qd,kd->qk"}> : () -> ()
    %cst_29 = arith.constant dense<0.000000e+00> : vector<16x16xf32>
    %70 = tpu.matmul %65, %67, %cst_29 {dimension_numbers = #tpu.dot_dimension_numbers<[1], [1], [0], [0], [0, 0, 1, 0], [], []>} : vector<16x8xbf16>, vector<16x8xbf16>, vector<16x16xf32> -> vector<16x16xf32>
    "tpu.trace_stop"() : () -> ()
    %cst_30 = arith.constant 0.353553385 : f32
    %71 = vector.broadcast %cst_30 : f32 to vector<16x16xf32>
    %72 = arith.mulf %70, %71 : vector<16x16xf32>
    %73 = arith.addf %72, %1 : vector<16x16xf32>
    %cst_31 = arith.constant dense<0xFF800000> : vector<16xf32>
    %74 = vector.multi_reduction <maximumf>, %73, %cst_31 [1] : vector<16x16xf32> to vector<16xf32>
    %75 = vector.shape_cast %74 : vector<16xf32> to vector<16x1xf32>
    %76 = vector.broadcast %75 : vector<16x1xf32> to vector<16x16xf32>
    %77 = arith.subf %73, %76 : vector<16x16xf32>
    %78 = math.exp %77 : vector<16x16xf32>
    %cst_32 = arith.constant dense<0.000000e+00> : vector<16xf32>
    %79 = vector.multi_reduction <add>, %78, %cst_32 [1] : vector<16x16xf32> to vector<16xf32>
    %80 = vector.shape_cast %79 : vector<16xf32> to vector<16x1xf32>
    %81 = tpu.reciprocal %80 {approx = true} : vector<16x1xf32> -> vector<16x1xf32>
    %82 = vector.broadcast %81 : vector<16x1xf32> to vector<16x16xf32>
    %83 = arith.mulf %78, %82 : vector<16x16xf32>
    %84 = arith.addf %61, %83 : vector<16x16xf32>
    %85 = arith.truncf %83 : vector<16x16xf32> to vector<16x16xbf16>
    %cst_33 = arith.constant dense<0.000000e+00> : vector<16x8xf32>
    %86 = tpu.matmul %85, %69, %cst_33 {dimension_numbers = #tpu.dot_dimension_numbers<[1], [0], [0], [1], [0, 0, 1, 1], [], []>} : vector<16x16xbf16>, vector<16x8xbf16>, vector<16x8xf32> -> vector<16x8xf32>
    %87 = vector.extract_strided_slice %16 {offsets = [0, 24], sizes = [16, 8], strides = [1, 1]} : vector<16x96xf32> to vector<16x8xf32>
    %88 = arith.truncf %87 : vector<16x8xf32> to vector<16x8xbf16>
    %89 = vector.extract_strided_slice %16 {offsets = [0, 56], sizes = [16, 8], strides = [1, 1]} : vector<16x96xf32> to vector<16x8xf32>
    %90 = arith.truncf %89 : vector<16x8xf32> to vector<16x8xbf16>
    %91 = vector.extract_strided_slice %16 {offsets = [0, 88], sizes = [16, 8], strides = [1, 1]} : vector<16x96xf32> to vector<16x8xf32>
    %92 = arith.truncf %91 : vector<16x8xf32> to vector<16x8xbf16>
    "tpu.trace_start"() <{level = 10 : i32, message = "qd,kd->qk"}> : () -> ()
    %cst_34 = arith.constant dense<0.000000e+00> : vector<16x16xf32>
    %93 = tpu.matmul %88, %90, %cst_34 {dimension_numbers = #tpu.dot_dimension_numbers<[1], [1], [0], [0], [0, 0, 1, 0], [], []>} : vector<16x8xbf16>, vector<16x8xbf16>, vector<16x16xf32> -> vector<16x16xf32>
    "tpu.trace_stop"() : () -> ()
    %cst_35 = arith.constant 0.353553385 : f32
    %94 = vector.broadcast %cst_35 : f32 to vector<16x16xf32>
    %95 = arith.mulf %93, %94 : vector<16x16xf32>
    %96 = arith.addf %95, %1 : vector<16x16xf32>
    %cst_36 = arith.constant dense<0xFF800000> : vector<16xf32>
    %97 = vector.multi_reduction <maximumf>, %96, %cst_36 [1] : vector<16x16xf32> to vector<16xf32>
    %98 = vector.shape_cast %97 : vector<16xf32> to vector<16x1xf32>
    %99 = vector.broadcast %98 : vector<16x1xf32> to vector<16x16xf32>
    %100 = arith.subf %96, %99 : vector<16x16xf32>
    %101 = math.exp %100 : vector<16x16xf32>
    %cst_37 = arith.constant dense<0.000000e+00> : vector<16xf32>
    %102 = vector.multi_reduction <add>, %101, %cst_37 [1] : vector<16x16xf32> to vector<16xf32>
    %103 = vector.shape_cast %102 : vector<16xf32> to vector<16x1xf32>
    %104 = tpu.reciprocal %103 {approx = true} : vector<16x1xf32> -> vector<16x1xf32>
    %105 = vector.broadcast %104 : vector<16x1xf32> to vector<16x16xf32>
    %106 = arith.mulf %101, %105 : vector<16x16xf32>
    %107 = arith.addf %84, %106 : vector<16x16xf32>
    %108 = arith.truncf %106 : vector<16x16xf32> to vector<16x16xbf16>
    %cst_38 = arith.constant dense<0.000000e+00> : vector<16x8xf32>
    %109 = tpu.matmul %108, %92, %cst_38 {dimension_numbers = #tpu.dot_dimension_numbers<[1], [0], [0], [1], [0, 0, 1, 1], [], []>} : vector<16x16xbf16>, vector<16x8xbf16>, vector<16x8xf32> -> vector<16x8xf32>
    %110 = tpu.concatenate %40, %63, %86, %109 in 1 : vector<16x8xf32>, vector<16x8xf32>, vector<16x8xf32>, vector<16x8xf32> -> vector<16x32xf32>
    %111 = arith.truncf %110 : vector<16x32xf32> to vector<16x32xbf16>
    %c0_39 = arith.constant 0 : index
    %c0_40 = arith.constant 0 : index
    %112 = vector.load %arg6[%c0_39, %c0_40] : memref<32x32xbf16, #tpu.memory_space<vmem>>, vector<32x32xbf16>
    %cst_41 = arith.constant dense<0.000000e+00> : vector<16x32xf32>
    %113 = tpu.matmul %111, %112, %cst_41 {dimension_numbers = #tpu.dot_dimension_numbers<[1], [0], [0], [1], [0, 0, 1, 1], [], []>} : vector<16x32xbf16>, vector<32x32xbf16>, vector<16x32xf32> -> vector<16x32xf32>
    %114 = vector.broadcast %5 : vector<1x32xf32> to vector<16x32xf32>
    %115 = arith.addf %113, %114 : vector<16x32xf32>
    %116 = arith.addf %0, %115 : vector<16x32xf32>
    %cst_42 = arith.constant dense<0.000000e+00> : vector<16xf32>
    %117 = vector.multi_reduction <add>, %116, %cst_42 [1] : vector<16x32xf32> to vector<16xf32>
    %118 = vector.shape_cast %117 : vector<16xf32> to vector<16x1xf32>
    %cst_43 = arith.constant 3.200000e+01 : f32
    %119 = vector.broadcast %cst_43 : f32 to vector<16x1xf32>
    %120 = arith.divf %118, %119 : vector<16x1xf32>
    %121 = vector.broadcast %120 : vector<16x1xf32> to vector<16x32xf32>
    %122 = arith.subf %116, %121 : vector<16x32xf32>
    %123 = arith.mulf %122, %122 : vector<16x32xf32>
    %cst_44 = arith.constant dense<0.000000e+00> : vector<16xf32>
    %124 = vector.multi_reduction <add>, %123, %cst_44 [1] : vector<16x32xf32> to vector<16xf32>
    %125 = vector.shape_cast %124 : vector<16xf32> to vector<16x1xf32>
    %cst_45 = arith.constant 3.200000e+01 : f32
    %126 = vector.broadcast %cst_45 : f32 to vector<16x1xf32>
    %127 = arith.divf %125, %126 : vector<16x1xf32>
    %128 = vector.broadcast %120 : vector<16x1xf32> to vector<16x32xf32>
    %129 = arith.subf %116, %128 : vector<16x32xf32>
    %cst_46 = arith.constant 9.99999974E-6 : f32
    %130 = vector.broadcast %cst_46 : f32 to vector<16x1xf32>
    %131 = arith.addf %127, %130 : vector<16x1xf32>
    %132 = math.rsqrt %131 : vector<16x1xf32>
    %133 = vector.broadcast %132 : vector<16x1xf32> to vector<16x32xf32>
    %134 = arith.mulf %129, %133 : vector<16x32xf32>
    %135 = vector.broadcast %6 : vector<1x32xf32> to vector<16x32xf32>
    %136 = arith.mulf %134, %135 : vector<16x32xf32>
    %137 = vector.broadcast %7 : vector<1x32xf32> to vector<16x32xf32>
    %138 = arith.addf %136, %137 : vector<16x32xf32>
    %139 = arith.truncf %138 : vector<16x32xf32> to vector<16x32xbf16>
    %c0_47 = arith.constant 0 : index
    %c0_48 = arith.constant 0 : index
    %140 = vector.load %arg7[%c0_47, %c0_48] : memref<32x128xbf16, #tpu.memory_space<vmem>>, vector<32x128xbf16>
    %cst_49 = arith.constant dense<0.000000e+00> : vector<16x128xf32>
    %141 = tpu.matmul %139, %140, %cst_49 {dimension_numbers = #tpu.dot_dimension_numbers<[1], [0], [0], [1], [0, 0, 1, 1], [], []>} : vector<16x32xbf16>, vector<32x128xbf16>, vector<16x128xf32> -> vector<16x128xf32>
    %142 = vector.broadcast %8 : vector<1x128xf32> to vector<16x128xf32>
    %143 = arith.addf %141, %142 : vector<16x128xf32>
    %cst_50 = arith.constant 5.000000e-01 : f32
    %144 = vector.broadcast %cst_50 : f32 to vector<16x128xf32>
    %145 = arith.mulf %144, %143 : vector<16x128xf32>
    %cst_51 = arith.constant 4.471500e-02 : f32
    %146 = vector.broadcast %cst_51 : f32 to vector<16x128xf32>
    %147 = arith.mulf %146, %143 : vector<16x128xf32>
    %148 = arith.mulf %147, %143 : vector<16x128xf32>
    %149 = arith.mulf %148, %143 : vector<16x128xf32>
    %150 = arith.addf %143, %149 : vector<16x128xf32>
    %cst_52 = arith.constant 0.797884583 : f32
    %151 = vector.broadcast %cst_52 : f32 to vector<16x128xf32>
    %152 = arith.mulf %151, %150 : vector<16x128xf32>
    %153 = math.tanh %152 : vector<16x128xf32>
    %cst_53 = arith.constant 1.000000e+00 : f32
    %154 = vector.broadcast %cst_53 : f32 to vector<16x128xf32>
    %155 = arith.addf %154, %153 : vector<16x128xf32>
    %156 = arith.mulf %145, %155 : vector<16x128xf32>
    %157 = arith.truncf %156 : vector<16x128xf32> to vector<16x128xbf16>
    %c0_54 = arith.constant 0 : index
    %c0_55 = arith.constant 0 : index
    %158 = vector.load %arg8[%c0_54, %c0_55] : memref<128x32xbf16, #tpu.memory_space<vmem>>, vector<128x32xbf16>
    %cst_56 = arith.constant dense<0.000000e+00> : vector<16x32xf32>
    %159 = tpu.matmul %157, %158, %cst_56 {dimension_numbers = #tpu.dot_dimension_numbers<[1], [0], [0], [1], [0, 0, 1, 1], [], []>} : vector<16x128xbf16>, vector<128x32xbf16>, vector<16x32xf32> -> vector<16x32xf32>
    %160 = vector.broadcast %9 : vector<1x32xf32> to vector<16x32xf32>
    %161 = arith.addf %159, %160 : vector<16x32xf32>
    %162 = arith.addf %138, %161 : vector<16x32xf32>
    %cst_57 = arith.constant dense<0.000000e+00> : vector<16xf32>
    %163 = vector.multi_reduction <add>, %162, %cst_57 [1] : vector<16x32xf32> to vector<16xf32>
    %164 = vector.shape_cast %163 : vector<16xf32> to vector<16x1xf32>
    %cst_58 = arith.constant 3.200000e+01 : f32
    %165 = vector.broadcast %cst_58 : f32 to vector<16x1xf32>
    %166 = arith.divf %164, %165 : vector<16x1xf32>
    %167 = vector.broadcast %166 : vector<16x1xf32> to vector<16x32xf32>
    %168 = arith.subf %162, %167 : vector<16x32xf32>
    %169 = arith.mulf %168, %168 : vector<16x32xf32>
    %cst_59 = arith.constant dense<0.000000e+00> : vector<16xf32>
    %170 = vector.multi_reduction <add>, %169, %cst_59 [1] : vector<16x32xf32> to vector<16xf32>
    %171 = vector.shape_cast %170 : vector<16xf32> to vector<16x1xf32>
    %cst_60 = arith.constant 3.200000e+01 : f32
    %172 = vector.broadcast %cst_60 : f32 to vector<16x1xf32>
    %173 = arith.divf %171, %172 : vector<16x1xf32>
    %174 = vector.broadcast %166 : vector<16x1xf32> to vector<16x32xf32>
    %175 = arith.subf %162, %174 : vector<16x32xf32>
    %cst_61 = arith.constant 9.99999974E-6 : f32
    %176 = vector.broadcast %cst_61 : f32 to vector<16x1xf32>
    %177 = arith.addf %173, %176 : vector<16x1xf32>
    %178 = math.rsqrt %177 : vector<16x1xf32>
    %179 = vector.broadcast %178 : vector<16x1xf32> to vector<16x32xf32>
    %180 = arith.mulf %175, %179 : vector<16x32xf32>
    %181 = vector.broadcast %10 : vector<1x32xf32> to vector<16x32xf32>
    %182 = arith.mulf %180, %181 : vector<16x32xf32>
    %183 = vector.broadcast %11 : vector<1x32xf32> to vector<16x32xf32>
    %184 = arith.addf %182, %183 : vector<16x32xf32>
    %cst_62 = arith.constant 0.000000e+00 : f32
    %185 = vector.broadcast %cst_62 : f32 to vector<16x96xf32>
    %186 = tpu.concatenate %184, %185 in 1 : vector<16x32xf32>, vector<16x96xf32> -> vector<16x128xf32>
    %c0_63 = arith.constant 0 : index
    %c0_64 = arith.constant 0 : index
    %187 = vector.load %arg10[%c0_63, %c0_64] : memref<16x128xf32, #tpu.memory_space<vmem>>, vector<16x128xf32>
    tpu.vector_store %arg10[%c0_63, %c0_64], %186 {strides = array<i32>} : memref<16x128xf32, #tpu.memory_space<vmem>>, vector<16x128xf32>,
    %cst_65 = arith.constant dense<0.000000e+00> : vector<2x32xf32>
    %188 = tpu.matmul %2, %184, %cst_65 {dimension_numbers = #tpu.dot_dimension_numbers<[1], [0], [0], [1], [0, 0, 1, 1], [], []>} : vector<2x16xf32>, vector<16x32xf32>, vector<2x32xf32> -> vector<2x32xf32>
    %cst_66 = arith.constant 2.500000e-01 : f32
    %189 = vector.broadcast %cst_66 : f32 to vector<16x16xf32>
    %190 = arith.mulf %107, %189 : vector<16x16xf32>
    %cst_67 = arith.constant dense<0.000000e+00> : vector<2x16xf32>
    %191 = tpu.matmul %3, %190, %cst_67 {dimension_numbers = #tpu.dot_dimension_numbers<[1], [0], [0], [1], [0, 0, 1, 1], [], []>} : vector<2x16xf32>, vector<16x16xf32>, vector<2x16xf32> -> vector<2x16xf32>
    %cst_68 = arith.constant 0.000000e+00 : f32
    %192 = vector.broadcast %cst_68 : f32 to vector<2x128xf32>
    %c0_69 = arith.constant 0 : index
    %c0_70 = arith.constant 0 : index
    %193 = vector.load %arg11[%c0_69, %c0_70] : memref<2x128xf32, #tpu.memory_space<vmem>>, vector<2x128xf32>
    tpu.vector_store %arg11[%c0_69, %c0_70], %192 {strides = array<i32>} : memref<2x128xf32, #tpu.memory_space<vmem>>, vector<2x128xf32>,
    %c0_71 = arith.constant 0 : index
    %c0_72 = arith.constant 0 : index
    %194 = vector.load %arg11[%c0_71, %c0_72] : memref<2x128xf32, #tpu.memory_space<vmem>>, vector<2x32xf32>
    tpu.vector_store %arg11[%c0_71, %c0_72], %188 {strides = array<i32>} : memref<2x128xf32, #tpu.memory_space<vmem>>, vector<2x32xf32>,
    %c0_73 = arith.constant 0 : index
    %c32 = arith.constant 32 : index
    %195 = vector.load %arg11[%c0_73, %c32] : memref<2x128xf32, #tpu.memory_space<vmem>>, vector<2x16xf32>
    tpu.vector_store %arg11[%c0_73, %c32], %191 {strides = array<i32>} : memref<2x128xf32, #tpu.memory_space<vmem>>, vector<2x16xf32>,
    return
  }
  func.func @transform_0(%arg0: i32) -> (i32, i32) {
    %c0_i32 = arith.constant 0 : i32
    %c0_i32_0 = arith.constant 0 : i32
    %c0_i32_1 = arith.constant 0 : i32
    return %c0_i32, %c0_i32_0 : i32, i32
  }
  func.func @transform_1(%arg0: i32) -> (i32, i32) {
    %c0_i32 = arith.constant 0 : i32
    %c0_i32_0 = arith.constant 0 : i32
    %c0_i32_1 = arith.constant 0 : i32
    return %c0_i32, %c0_i32_0 : i32, i32
  }
  func.func @transform_2(%arg0: i32) -> (i32, i32) {
    %c0_i32 = arith.constant 0 : i32
    %c0_i32_0 = arith.constant 0 : i32
    %c0_i32_1 = arith.constant 0 : i32
    return %c0_i32, %c0_i32_0 : i32, i32
  }
  func.func @transform_3(%arg0: i32) -> (i32, i32) {
    %c0_i32 = arith.constant 0 : i32
    %c0_i32_0 = arith.constant 0 : i32
    %c0_i32_1 = arith.constant 0 : i32
    return %c0_i32, %c0_i32_0 : i32, i32
  }
  func.func @transform_4(%arg0: i32) -> (i32, i32) {
    %c0_i32 = arith.constant 0 : i32
    %c0_i32_0 = arith.constant 0 : i32
    %c0_i32_1 = arith.constant 0 : i32
    return %c0_i32, %c0_i32_0 : i32, i32
  }
  func.func @transform_5(%arg0: i32) -> (i32, i32) {
    %c0_i32 = arith.constant 0 : i32
    %c0_i32_0 = arith.constant 0 : i32
    %c0_i32_1 = arith.constant 0 : i32
    return %c0_i32, %c0_i32_0 : i32, i32
  }
  func.func @transform_6(%arg0: i32) -> (i32, i32) {
    %c0_i32 = arith.constant 0 : i32
    %c0_i32_0 = arith.constant 0 : i32
    %c0_i32_1 = arith.constant 0 : i32
    return %c0_i32, %c0_i32_0 : i32, i32
  }
  func.func @transform_7(%arg0: i32) -> (i32, i32) {
    %c0_i32 = arith.constant 0 : i32
    %c0_i32_0 = arith.constant 0 : i32
    %c0_i32_1 = arith.constant 0 : i32
    return %c0_i32, %c0_i32_0 : i32, i32
  }
  func.func @transform_8(%arg0: i32) -> (i32, i32) {
    %c0_i32 = arith.constant 0 : i32
    %c0_i32_0 = arith.constant 0 : i32
    %c0_i32_1 = arith.constant 0 : i32
    return %c0_i32, %c0_i32_0 : i32, i32
  }
  func.func @transform_9(%arg0: i32) -> (i32, i32) {
    %c0_i32 = arith.constant 0 : i32
    %c0_i32_0 = arith.constant 0 : i32
    %c0_i32_1 = arith.constant 0 : i32
    return %c0_i32, %c0_i32_0 : i32, i32
  }
  func.func @transform_10(%arg0: i32) -> (i32, i32) {
    %c0_i32 = arith.constant 0 : i32
    %c0_i32_0 = arith.constant 0 : i32
    %c0_i32_1 = arith.constant 0 : i32
    return %c0_i32, %c0_i32_0 : i32, i32
  }
}

</mosaic_0001>

<llo_original>
// kernel: tpu_custom_call.1
$region0: #{tpu_custom_call.1}
  #allocation0 [shape = 'u32[]', space=smem, size = 0x4, offset = 0x4, fixed_abs, tag = 'smem constant byte address 0x4 - core index']
  #allocation1 [shape = 'u32[144,128]{1,0:T(1,128)}', space=vmem, size = 0x12000, scoped, tag = 'internal scratch']
  %s0 = inlined_call_operand.vmem [shape: f32[16,32], index: 0, kind: input, shape index: {}]
  %s1 = inlined_call_operand.vmem [shape: f32[16,16], index: 1, kind: input, shape index: {}]
  %s2 = inlined_call_operand.hbm [shape: f32[2,16], index: 2, kind: input, shape index: {}]
  %s3 = inlined_call_operand.hbm [shape: f32[2,16], index: 3, kind: input, shape index: {}]
  %s4 = inlined_call_operand.vmem [shape: bf16[32,96], index: 4, kind: input, shape index: {}]
  %s5 = inlined_call_operand.vmem [shape: bf16[32,32], index: 5, kind: input, shape index: {}]
  %s6 = inlined_call_operand.vmem [shape: bf16[32,128], index: 6, kind: input, shape index: {}]
  %s7 = inlined_call_operand.vmem [shape: bf16[128,32], index: 7, kind: input, shape index: {}]
  %s8 = inlined_call_operand.vmem [shape: f32[8,128], index: 8, kind: input, shape index: {}]
  %s9 = inlined_call_operand.hbm [shape: f32[16,128], index: 9, kind: output, shape index: {0}]
  %s10 = inlined_call_operand.hbm [shape: f32[2,128], index: 10, kind: output, shape index: {1}]
  %11 = xla_tuple %s9, %s10
  %s12 = sld [smem:[#allocation0]]
  $region62: #{tpu_custom_call.1} parent=0
    _
  %s14 = ssub.s32 1, %s12
  %s15 = scalar_select 0, %s14, %s12
  $region1: #{tpu_custom_call.1} parent=0
    #allocation2 [shape = 'u8[1024]{0}', space=vmem, size = 0x400, scoped, tag = 'input window, operand 2, single buffered']
    #allocation3 [shape = 's32[1]{0}', space=sflag, size = 0x4, scoped, tag = 'scoped memory for tpu_custom_call.1']
    #allocation4 [shape = 's32[1]{0}', space=sflag, size = 0x4, scoped, tag = 'scoped memory for tpu_custom_call.1']
    #allocation5 [shape = 'u8[1024]{0}', space=vmem, size = 0x400, scoped, tag = 'input window, operand 3, single buffered']
    #allocation6 [shape = 's32[1]{0}', space=sflag, size = 0x4, scoped, tag = 'scoped memory for tpu_custom_call.1']
    #allocation7 [shape = 'u8[8192]{0}', space=vmem, size = 0x2000, scoped, tag = 'output window, operand 0, single buffered']
    #allocation8 [shape = 'u8[1024]{0}', space=vmem, size = 0x400, scoped, tag = 'output window, operand 1, single buffered']
    #allocation9 [shape = 's32[1]{0}', space=sflag, size = 0x4, scoped, tag = 'scoped memory for tpu_custom_call.1']
    %16 = vsyncpa [#allocation3], 0
    %17 = vsyncpa [#allocation6], 0
    %18 = vsyncpa [#allocation4], 0
    %19 = vsyncpa [#allocation9], 0
    // Predicated region
    $region2: #{tpu_custom_call.1} parent=1 // pred_check
      _
    $region3: #{tpu_custom_call.1} parent=1 // pred_check_branch
      %21 = sbr.rel (0) target = $region5
    $region4: #{tpu_custom_call.1} parent=1 // pred_region
      _
    $region5: #{tpu_custom_call.1} parent=1 // pred_fallthru
      _
    // Predicated region
    $region6: #{tpu_custom_call.1} parent=1 // pred_check
      _
    $region7: #{tpu_custom_call.1} parent=1 // pred_check_branch
      %23 = sbr.rel (0) target = $region9
    $region8: #{tpu_custom_call.1} parent=1 // pred_region
      _
    $region9: #{tpu_custom_call.1} parent=1 // pred_fallthru
      _
    // Predicated region
    $region10: #{tpu_custom_call.1} parent=1 // pred_check
      _
    $region11: #{tpu_custom_call.1} parent=1 // pred_check_branch
      %25 = sbr.rel (0) target = $region13
    $region12: #{tpu_custom_call.1} parent=1 // pred_region
      %s27 = ssub.s32 32, 32
      %28 = vsyncadd [#allocation3], %s27
      %s30 = sshll.u32 [#allocation2], 4
      %s31 = int_to_ptr.vmem [resolvable:$true] %s30
      %33 = dma.hbm_to_vmem [thread:$0]  %s2, 32, %s31, [#allocation3]
    $region13: #{tpu_custom_call.1} parent=1 // pred_fallthru
      _
    // Predicated region
    $region14: #{tpu_custom_call.1} parent=1 // pred_check
      _
    $region15: #{tpu_custom_call.1} parent=1 // pred_check_branch
      %35 = sbr.rel (0) target = $region17
    $region16: #{tpu_custom_call.1} parent=1 // pred_region
      %s37 = ssub.s32 32, 32
      %38 = vsyncadd [#allocation6], %s37
      %s40 = sshll.u32 [#allocation5], 4
      %s41 = int_to_ptr.vmem [resolvable:$true] %s40
      %43 = dma.hbm_to_vmem [thread:$0]  %s3, 32, %s41, [#allocation6]
    $region17: #{tpu_custom_call.1} parent=1 // pred_fallthru
      _
    // Predicated region
    $region18: #{tpu_custom_call.1} parent=1 // pred_check
      _
    $region19: #{tpu_custom_call.1} parent=1 // pred_check_branch
      %45 = sbr.rel (0) target = $region21
    $region20: #{tpu_custom_call.1} parent=1 // pred_region
      _
    $region21: #{tpu_custom_call.1} parent=1 // pred_fallthru
      _
    // Predicated region
    $region22: #{tpu_custom_call.1} parent=1 // pred_check
      _
    $region23: #{tpu_custom_call.1} parent=1 // pred_check_branch
      %47 = sbr.rel (0) target = $region25
    $region24: #{tpu_custom_call.1} parent=1 // pred_region
      _
    $region25: #{tpu_custom_call.1} parent=1 // pred_fallthru
      _
    // Predicated region
    $region26: #{tpu_custom_call.1} parent=1 // pred_check
      _
    $region27: #{tpu_custom_call.1} parent=1 // pred_check_branch
      %49 = sbr.rel (0) target = $region29
    $region28: #{tpu_custom_call.1} parent=1 // pred_region
      _
    $region29: #{tpu_custom_call.1} parent=1 // pred_fallthru
      _
    // Predicated region
    $region30: #{tpu_custom_call.1} parent=1 // pred_check
      _
    $region31: #{tpu_custom_call.1} parent=1 // pred_check_branch
      %51 = sbr.rel (0) target = $region33
    $region32: #{tpu_custom_call.1} parent=1 // pred_region
      _
    $region33: #{tpu_custom_call.1} parent=1 // pred_fallthru
      _
    // Predicated region
    $region34: #{tpu_custom_call.1} parent=1 // pred_check
      _
    $region35: #{tpu_custom_call.1} parent=1 // pred_check_branch
      %53 = sbr.rel (0) target = $region37
    $region36: #{tpu_custom_call.1} parent=1 // pred_region
      _
    $region37: #{tpu_custom_call.1} parent=1 // pred_fallthru
      _
    // Predicated region
    $region38: #{tpu_custom_call.1} parent=1 // pred_check
      _
    $region39: #{tpu_custom_call.1} parent=1 // pred_check_branch
      %55 = sbr.rel (0) target = $region41
    $region40: #{tpu_custom_call.1} parent=1 // pred_region
      %56 = dma.done [#allocation3], 32
    $region41: #{tpu_custom_call.1} parent=1 // pred_fallthru
      _
    // Predicated region
    $region42: #{tpu_custom_call.1} parent=1 // pred_check
      _
    $region43: #{tpu_custom_call.1} parent=1 // pred_check_branch
      %58 = sbr.rel (0) target = $region45
    $region44: #{tpu_custom_call.1} parent=1 // pred_region
      %59 = dma.done [#allocation6], 32
    $region45: #{tpu_custom_call.1} parent=1 // pred_fallthru
      _
    %v61 = vld [vmem:[%s0] sm:$0xff]
    %v62 = vld [vmem:[%s0 + $0x8] sm:$0xff]
    %v63 = vld [vmem:[%s1] sm:$0xff]
    %v64 = vld [vmem:[%s1 + $0x8] sm:$0xff]
    %v65 = vld [vmem:[#allocation2] sm:$0x3]
    %v66 = vld [vmem:[#allocation5] sm:$0x3]
    %v67 = vld [vmem:[%s8] sm:$0x1]
    %v68 = vld [vmem:[%s8 + $0x1] sm:$0x1]
    %v69 = vld [vmem:[%s8 + $0x2] sm:$0x1]
    %v70 = vld [vmem:[%s8 + $0x3] sm:$0x1]
    %v71 = vld [vmem:[%s8 + $0x4] sm:$0x1]
    %v72 = vld [vmem:[%s8 + $0x5] sm:$0x1]
    %v73 = vld [vmem:[%s8 + $0x6] sm:$0x1]
    %v74 = vld [vmem:[%s8 + $0x7] sm:$0x1]
    %v75 = vpack.c.bf16 %v62, %v61
    %v76 = vld [vmem:[%s4] sm:$0xf]
    %v77 = vld [vmem:[%s4 + $0x4] sm:$0xf]
    %v78 = vld [vmem:[%s4 + $0x8] sm:$0xf]
    %v79 = vld [vmem:[%s4 + $0xc] sm:$0xf]
    %v80 = vlaneseq
    %v81 = vshrl.u32 %v80, 7
    %v82 = vsub.s32 0, %v81
    %v83 = vrot.slane %v67, %v82
    %v88 = vunpack.c.l.b16 %v76
    %v89 = vunpack.c.l.b16 %v77
    %v90 = vunpack.c.l.b16 %v78
    %v91 = vunpack.c.l.b16 %v79
    %v92 = vpack.c.b16 %v89, %v88
    %v93 = vpack.c.b16 %v91, %v90
    %vm96 = vcmask 261120
    %v98 = vsel %vm96, %v75, 0
    %100 = vmatprep.subr.bf16.mxu0 0
    %101 = vmatpush1.bf16.msra.mxu0 0
    %102 = vmatprep.subr.bf16.mxu0 0
    %103 = vmatpush1.bf16.msra.mxu0 0
    %104 = vmatprep.subr.bf16.mxu0 0
    %105 = vmatpush1.bf16.msra.mxu0 0
    %106 = vmatprep.subr.bf16.mxu0 0
    %107 = vmatpush1.bf16.msra.mxu0 0
    %108 = vmatprep.subr.bf16.mxu0 0
    %109 = vmatpush1.bf16.msra.mxu0 0
    %110 = vmatprep.subr.bf16.mxu0 0
    %111 = vmatpush1.bf16.msra.mxu0 0
    %112 = vmatprep.subr.bf16.mxu0 0
    %113 = vmatpush1.bf16.msra.mxu0 %v93
    %114 = vmatprep.subr.bf16.mxu0 0
    %115 = vmatpush1.bf16.msra.mxu0 %v92
    %116 = vmatprep.subr.bf16.mxu0 0
    %117 = vmatpush2.bf16.msra.mxu0 0
    %118 = vmatprep.subr.bf16.mxu0 0
    %119 = vmatpush2.bf16.msra.mxu0 0
    %120 = vmatprep.subr.bf16.mxu0 0
    %121 = vmatpush2.bf16.msra.mxu0 0
    %122 = vmatprep.subr.bf16.mxu0 0
    %123 = vmatpush2.bf16.msra.mxu0 0
    %124 = vmatprep.subr.bf16.mxu0 0
    %125 = vmatpush2.bf16.msra.mxu0 0
    %126 = vmatprep.subr.bf16.mxu0 0
    %127 = vmatpush2.bf16.msra.mxu0 0
    %128 = vmatprep.subr.bf16.mxu0 0
    %129 = vmatpush2.bf16.msra.mxu0 0
    %130 = vmatprep.subr.bf16.mxu0 0
    %131 = vmatpush2.bf16.msra.mxu0 0
    %132 = vmatprep.mubr.bf16.mxu0 0
    %133 = vmatmul.mubr.bf16.gmra.mxu0 %v98
    %v134 = vpop.f32.mrf.mxu0
    %v135 = vadd.f32 %v83, %v134
    %v136 = vpop.f32.mrf.mxu0
    %v137 = vpop.f32.mrf.mxu0
    %v138 = vadd.f32 %v83, %v137
    %v139 = vpop.f32.mrf.mxu0
    %140 = vdwg.mxu0
    %v141 = vpack.c.bf16 %v138, %v135
    %143 = vrot.lane.b32.xlu0 %v141, 96
    %v144 = vpop.permute.xlu0 %143
    %vm145 = vcmask 64512
    %v147 = vsel %vm145, %v141, 0
    %v150 = vsel %vm145, %v144, 0
    %152 = vmatprep.subr.bf16.mxu0 0
    %153 = vmatpush1.bf16.xpose.msra.mxu0 0
    %154 = vmatprep.subr.bf16.mxu0 0
    %155 = vmatpush1.bf16.xpose.msra.mxu0 0
    %156 = vmatprep.subr.bf16.mxu0 0
    %157 = vmatpush1.bf16.xpose.msra.mxu0 0
    %158 = vmatprep.subr.bf16.mxu0 0
    %159 = vmatpush1.bf16.xpose.msra.mxu0 0
    %160 = vmatprep.subr.bf16.mxu0 0
    %161 = vmatpush1.bf16.xpose.msra.mxu0 0
    %162 = vmatprep.subr.bf16.mxu0 0
    %163 = vmatpush1.bf16.xpose.msra.mxu0 0
    %164 = vmatprep.subr.bf16.mxu0 0
    %165 = vmatpush1.bf16.xpose.msra.mxu0 0
    %166 = vmatprep.subr.bf16.mxu0 0
    %167 = vmatpush1.bf16.xpose.msra.mxu0 %v150
    %168 = vmatprep.subr.bf16.mxu0 0
    %169 = vmatpush2.bf16.xpose.msra.mxu0 0
    %170 = vmatprep.subr.bf16.mxu0 0
    %171 = vmatpush2.bf16.xpose.msra.mxu0 0
    %172 = vmatprep.subr.bf16.mxu0 0
    %173 = vmatpush2.bf16.xpose.msra.mxu0 0
    %174 = vmatprep.subr.bf16.mxu0 0
    %175 = vmatpush2.bf16.xpose.msra.mxu0 0
    %176 = vmatprep.subr.bf16.mxu0 0
    %177 = vmatpush2.bf16.xpose.msra.mxu0 0
    %178 = vmatprep.subr.bf16.mxu0 0
    %179 = vmatpush2.bf16.xpose.msra.mxu0 0
    %180 = vmatprep.subr.bf16.mxu0 0
    %181 = vmatpush2.bf16.xpose.msra.mxu0 0
    %182 = vmatprep.subr.bf16.mxu0 0
    %183 = vmatpush2.bf16.xpose.msra.mxu0 0
    %184 = vmatprep.mubr.bf16.mxu0 0
    %185 = vmatmul.mubr.bf16.gmra.mxu0 %v147
    %v186 = vpop.f32.mrf.mxu0
    %v187 = vadd.f32 0.0, %v186
    %v188 = vpop.f32.mrf.mxu0
    %v189 = vpop.f32.mrf.mxu0
    %v190 = vadd.f32 0.0, %v189
    %v191 = vpop.f32.mrf.mxu0
    %192 = vdwg.mxu0
    %v193 = vmul.f32 %v187, 0.35355338
    %v194 = vmul.f32 %v190, 0.35355338
    %v195 = vadd.f32 %v193, %v63
    %v196 = vadd.f32 %v194, %v64
    %vm197 = vcmask 130048
    %v198 = vsel %vm197, %v195, -inf
    %199 = vmax.xlane.f32.xlu0 %v198
    %v200 = vpop.xlane.xlu0 %199
    %v201 = vsel %vm197, %v196, -inf
    %202 = vmax.xlane.f32.xlu0 %v201
    %v203 = vpop.xlane.xlu0 %202
    %v204 = vsub.f32 %v195, %v200
    %v205 = vsub.f32 %v196, %v203
    %v206 = vmul.f32 %v204, 1.442695
    %v207 = vpow.pop %v206
    %v208 = vmul.f32 %v205, 1.442695
    %v209 = vpow.pop %v208
    %v210 = vsel %vm197, %v207, 0.0
    %211 = vadd.xlane.f32.xlu0 %v210
    %v212 = vpop.xlane.xlu0 %211
    %v213 = vsel %vm197, %v209, 0.0
    %214 = vadd.xlane.f32.xlu0 %v213
    %v215 = vpop.xlane.xlu0 %214
    %v216 = vrcp.pop %v212
    %v217 = vrcp.pop %v215
    %v218 = vmul.f32 %v207, %v216
    %v219 = vmul.f32 %v209, %v217
    %v220 = vadd.f32 %v218, 0.0
    %v221 = vadd.f32 %v219, 0.0
    %v222 = vpack.c.bf16 %v219, %v218
    %223 = vrot.lane.b32.xlu0 %v141, 64
    %v224 = vpop.permute.xlu0 %223
    %v227 = vsel %vm197, %v222, 0
    %229 = vmatprep.subr.bf16.mxu0 0
    %230 = vmatpush1.bf16.msra.mxu0 0
    %231 = vmatprep.subr.bf16.mxu0 0
    %232 = vmatpush1.bf16.msra.mxu0 0
    %233 = vmatprep.subr.bf16.mxu0 0
    %234 = vmatpush1.bf16.msra.mxu0 0
    %235 = vmatprep.subr.bf16.mxu0 0
    %236 = vmatpush1.bf16.msra.mxu0 0
    %237 = vmatprep.subr.bf16.mxu0 0
    %238 = vmatpush1.bf16.msra.mxu0 0
    %239 = vmatprep.subr.bf16.mxu0 0
    %240 = vmatpush1.bf16.msra.mxu0 0
    %241 = vmatprep.subr.bf16.mxu0 0
    %242 = vmatpush1.bf16.msra.mxu0 0
    %243 = vmatprep.subr.bf16.mxu0 0
    %244 = vmatpush1.bf16.msra.mxu0 %v224
    %245 = vmatprep.subr.bf16.mxu0 0
    %246 = vmatpush2.bf16.msra.mxu0 0
    %247 = vmatprep.subr.bf16.mxu0 0
    %248 = vmatpush2.bf16.msra.mxu0 0
    %249 = vmatprep.subr.bf16.mxu0 0
    %250 = vmatpush2.bf16.msra.mxu0 0
    %251 = vmatprep.subr.bf16.mxu0 0
    %252 = vmatpush2.bf16.msra.mxu0 0
    %253 = vmatprep.subr.bf16.mxu0 0
    %254 = vmatpush2.bf16.msra.mxu0 0
    %255 = vmatprep.subr.bf16.mxu0 0
    %256 = vmatpush2.bf16.msra.mxu0 0
    %257 = vmatprep.subr.bf16.mxu0 0
    %258 = vmatpush2.bf16.msra.mxu0 0
    %259 = vmatprep.subr.bf16.mxu0 0
    %260 = vmatpush2.bf16.msra.mxu0 0
    %261 = vmatprep.mubr.bf16.mxu0 0
    %262 = vmatmul.mubr.bf16.gmra.mxu0 %v227
    %v263 = vpop.f32.mrf.mxu0
    %v264 = vadd.f32 0.0, %v263
    %v265 = vpop.f32.mrf.mxu0
    %v266 = vpop.f32.mrf.mxu0
    %v267 = vadd.f32 0.0, %v266
    %v268 = vpop.f32.mrf.mxu0
    %269 = vdwg.mxu0
    %270 = vrot.lane.b32.xlu0 %v141, 120
    %v271 = vpop.permute.xlu0 %270
    %272 = vrot.lane.b32.xlu0 %v141, 88
    %v273 = vpop.permute.xlu0 %272
    %v275 = vsel %vm145, %v271, 0
    %v278 = vsel %vm145, %v273, 0
    %280 = vmatprep.subr.bf16.mxu0 0
    %281 = vmatpush1.bf16.xpose.msra.mxu0 0
    %282 = vmatprep.subr.bf16.mxu0 0
    %283 = vmatpush1.bf16.xpose.msra.mxu0 0
    %284 = vmatprep.subr.bf16.mxu0 0
    %285 = vmatpush1.bf16.xpose.msra.mxu0 0
    %286 = vmatprep.subr.bf16.mxu0 0
    %287 = vmatpush1.bf16.xpose.msra.mxu0 0
    %288 = vmatprep.subr.bf16.mxu0 0
    %289 = vmatpush1.bf16.xpose.msra.mxu0 0
    %290 = vmatprep.subr.bf16.mxu0 0
    %291 = vmatpush1.bf16.xpose.msra.mxu0 0
    %292 = vmatprep.subr.bf16.mxu0 0
    %293 = vmatpush1.bf16.xpose.msra.mxu0 0
    %294 = vmatprep.subr.bf16.mxu0 0
    %295 = vmatpush1.bf16.xpose.msra.mxu0 %v278
    %296 = vmatprep.subr.bf16.mxu0 0
    %297 = vmatpush2.bf16.xpose.msra.mxu0 0
    %298 = vmatprep.subr.bf16.mxu0 0
    %299 = vmatpush2.bf16.xpose.msra.mxu0 0
    %300 = vmatprep.subr.bf16.mxu0 0
    %301 = vmatpush2.bf16.xpose.msra.mxu0 0
    %302 = vmatprep.subr.bf16.mxu0 0
    %303 = vmatpush2.bf16.xpose.msra.mxu0 0
    %304 = vmatprep.subr.bf16.mxu0 0
    %305 = vmatpush2.bf16.xpose.msra.mxu0 0
    %306 = vmatprep.subr.bf16.mxu0 0
    %307 = vmatpush2.bf16.xpose.msra.mxu0 0
    %308 = vmatprep.subr.bf16.mxu0 0
    %309 = vmatpush2.bf16.xpose.msra.mxu0 0
    %310 = vmatprep.subr.bf16.mxu0 0
    %311 = vmatpush2.bf16.xpose.msra.mxu0 0
    %312 = vmatprep.mubr.bf16.mxu0 0
    %313 = vmatmul.mubr.bf16.gmra.mxu0 %v275
    %v314 = vpop.f32.mrf.mxu0
    %v315 = vadd.f32 0.0, %v314
    %v316 = vpop.f32.mrf.mxu0
    %v317 = vpop.f32.mrf.mxu0
    %v318 = vadd.f32 0.0, %v317
    %v319 = vpop.f32.mrf.mxu0
    %320 = vdwg.mxu0
    %v321 = vmul.f32 %v315, 0.35355338
    %v322 = vmul.f32 %v318, 0.35355338
    %v323 = vadd.f32 %v321, %v63
    %v324 = vadd.f32 %v322, %v64
    %v325 = vsel %vm197, %v323, -inf
    %326 = vmax.xlane.f32.xlu0 %v325
    %v327 = vpop.xlane.xlu0 %326
    %v328 = vsel %vm197, %v324, -inf
    %329 = vmax.xlane.f32.xlu0 %v328
    %v330 = vpop.xlane.xlu0 %329
    %v331 = vsub.f32 %v323, %v327
    %v332 = vsub.f32 %v324, %v330
    %v333 = vmul.f32 %v331, 1.442695
    %v334 = vpow.pop %v333
    %v335 = vmul.f32 %v332, 1.442695
    %v336 = vpow.pop %v335
    %v337 = vsel %vm197, %v334, 0.0
    %338 = vadd.xlane.f32.xlu0 %v337
    %v339 = vpop.xlane.xlu0 %338
    %v340 = vsel %vm197, %v336, 0.0
    %341 = vadd.xlane.f32.xlu0 %v340
    %v342 = vpop.xlane.xlu0 %341
    %v343 = vrcp.pop %v339
    %v344 = vrcp.pop %v342
    %v345 = vmul.f32 %v334, %v343
    %v346 = vmul.f32 %v336, %v344
    %v347 = vadd.f32 %v220, %v345
    %v348 = vadd.f32 %v221, %v346
    %v349 = vpack.c.bf16 %v346, %v345
    %350 = vrot.lane.b32.xlu0 %v141, 56
    %v351 = vpop.permute.xlu0 %350
    %v354 = vsel %vm197, %v349, 0
    %356 = vmatprep.subr.bf16.mxu0 0
    %357 = vmatpush1.bf16.msra.mxu0 0
    %358 = vmatprep.subr.bf16.mxu0 0
    %359 = vmatpush1.bf16.msra.mxu0 0
    %360 = vmatprep.subr.bf16.mxu0 0
    %361 = vmatpush1.bf16.msra.mxu0 0
    %362 = vmatprep.subr.bf16.mxu0 0
    %363 = vmatpush1.bf16.msra.mxu0 0
    %364 = vmatprep.subr.bf16.mxu0 0
    %365 = vmatpush1.bf16.msra.mxu0 0
    %366 = vmatprep.subr.bf16.mxu0 0
    %367 = vmatpush1.bf16.msra.mxu0 0
    %368 = vmatprep.subr.bf16.mxu0 0
    %369 = vmatpush1.bf16.msra.mxu0 0
    %370 = vmatprep.subr.bf16.mxu0 0
    %371 = vmatpush1.bf16.msra.mxu0 %v351
    %372 = vmatprep.subr.bf16.mxu0 0
    %373 = vmatpush2.bf16.msra.mxu0 0
    %374 = vmatprep.subr.bf16.mxu0 0
    %375 = vmatpush2.bf16.msra.mxu0 0
    %376 = vmatprep.subr.bf16.mxu0 0
    %377 = vmatpush2.bf16.msra.mxu0 0
    %378 = vmatprep.subr.bf16.mxu0 0
    %379 = vmatpush2.bf16.msra.mxu0 0
    %380 = vmatprep.subr.bf16.mxu0 0
    %381 = vmatpush2.bf16.msra.mxu0 0
    %382 = vmatprep.subr.bf16.mxu0 0
    %383 = vmatpush2.bf16.msra.mxu0 0
    %384 = vmatprep.subr.bf16.mxu0 0
    %385 = vmatpush2.bf16.msra.mxu0 0
    %386 = vmatprep.subr.bf16.mxu0 0
    %387 = vmatpush2.bf16.msra.mxu0 0
    %388 = vmatprep.mubr.bf16.mxu0 0
    %389 = vmatmul.mubr.bf16.gmra.mxu0 %v354
    %v390 = vpop.f32.mrf.mxu0
    %v391 = vadd.f32 0.0, %v390
    %v392 = vpop.f32.mrf.mxu0
    %v393 = vpop.f32.mrf.mxu0
    %v394 = vadd.f32 0.0, %v393
    %v395 = vpop.f32.mrf.mxu0
    %396 = vdwg.mxu0
    %397 = vrot.lane.b32.xlu0 %v141, 112
    %v398 = vpop.permute.xlu0 %397
    %399 = vrot.lane.b32.xlu0 %v141, 80
    %v400 = vpop.permute.xlu0 %399
    %v402 = vsel %vm145, %v398, 0
    %v405 = vsel %vm145, %v400, 0
    %407 = vmatprep.subr.bf16.mxu0 0
    %408 = vmatpush1.bf16.xpose.msra.mxu0 0
    %409 = vmatprep.subr.bf16.mxu0 0
    %410 = vmatpush1.bf16.xpose.msra.mxu0 0
    %411 = vmatprep.subr.bf16.mxu0 0
    %412 = vmatpush1.bf16.xpose.msra.mxu0 0
    %413 = vmatprep.subr.bf16.mxu0 0
    %414 = vmatpush1.bf16.xpose.msra.mxu0 0
    %415 = vmatprep.subr.bf16.mxu0 0
    %416 = vmatpush1.bf16.xpose.msra.mxu0 0
    %417 = vmatprep.subr.bf16.mxu0 0
    %418 = vmatpush1.bf16.xpose.msra.mxu0 0
    %419 = vmatprep.subr.bf16.mxu0 0
    %420 = vmatpush1.bf16.xpose.msra.mxu0 0
    %421 = vmatprep.subr.bf16.mxu0 0
    %422 = vmatpush1.bf16.xpose.msra.mxu0 %v405
    %423 = vmatprep.subr.bf16.mxu0 0
    %424 = vmatpush2.bf16.xpose.msra.mxu0 0
    %425 = vmatprep.subr.bf16.mxu0 0
    %426 = vmatpush2.bf16.xpose.msra.mxu0 0
    %427 = vmatprep.subr.bf16.mxu0 0
    %428 = vmatpush2.bf16.xpose.msra.mxu0 0
    %429 = vmatprep.subr.bf16.mxu0 0
    %430 = vmatpush2.bf16.xpose.msra.mxu0 0
    %431 = vmatprep.subr.bf16.mxu0 0
    %432 = vmatpush2.bf16.xpose.msra.mxu0 0
    %433 = vmatprep.subr.bf16.mxu0 0
    %434 = vmatpush2.bf16.xpose.msra.mxu0 0
    %435 = vmatprep.subr.bf16.mxu0 0
    %436 = vmatpush2.bf16.xpose.msra.mxu0 0
    %437 = vmatprep.subr.bf16.mxu0 0
    %438 = vmatpush2.bf16.xpose.msra.mxu0 0
    %439 = vmatprep.mubr.bf16.mxu0 0
    %440 = vmatmul.mubr.bf16.gmra.mxu0 %v402
    %v441 = vpop.f32.mrf.mxu0
    %v442 = vadd.f32 0.0, %v441
    %v443 = vpop.f32.mrf.mxu0
    %v444 = vpop.f32.mrf.mxu0
    %v445 = vadd.f32 0.0, %v444
    %v446 = vpop.f32.mrf.mxu0
    %447 = vdwg.mxu0
    %v448 = vmul.f32 %v442, 0.35355338
    %v449 = vmul.f32 %v445, 0.35355338
    %v450 = vadd.f32 %v448, %v63
    %v451 = vadd.f32 %v449, %v64
    %v452 = vsel %vm197, %v450, -inf
    %453 = vmax.xlane.f32.xlu0 %v452
    %v454 = vpop.xlane.xlu0 %453
    %v455 = vsel %vm197, %v451, -inf
    %456 = vmax.xlane.f32.xlu0 %v455
    %v457 = vpop.xlane.xlu0 %456
    %v458 = vsub.f32 %v450, %v454
    %v459 = vsub.f32 %v451, %v457
    %v460 = vmul.f32 %v458, 1.442695
    %v461 = vpow.pop %v460
    %v462 = vmul.f32 %v459, 1.442695
    %v463 = vpow.pop %v462
    %v464 = vsel %vm197, %v461, 0.0
    %465 = vadd.xlane.f32.xlu0 %v464
    %v466 = vpop.xlane.xlu0 %465
    %v467 = vsel %vm197, %v463, 0.0
    %468 = vadd.xlane.f32.xlu0 %v467
    %v469 = vpop.xlane.xlu0 %468
    %v470 = vrcp.pop %v466
    %v471 = vrcp.pop %v469
    %v472 = vmul.f32 %v461, %v470
    %v473 = vmul.f32 %v463, %v471
    %v474 = vadd.f32 %v347, %v472
    %v475 = vadd.f32 %v348, %v473
    %v476 = vpack.c.bf16 %v473, %v472
    %477 = vrot.lane.b32.xlu0 %v141, 48
    %v478 = vpop.permute.xlu0 %477
    %v481 = vsel %vm197, %v476, 0
    %483 = vmatprep.subr.bf16.mxu0 0
    %484 = vmatpush1.bf16.msra.mxu0 0
    %485 = vmatprep.subr.bf16.mxu0 0
    %486 = vmatpush1.bf16.msra.mxu0 0
    %487 = vmatprep.subr.bf16.mxu0 0
    %488 = vmatpush1.bf16.msra.mxu0 0
    %489 = vmatprep.subr.bf16.mxu0 0
    %490 = vmatpush1.bf16.msra.mxu0 0
    %491 = vmatprep.subr.bf16.mxu0 0
    %492 = vmatpush1.bf16.msra.mxu0 0
    %493 = vmatprep.subr.bf16.mxu0 0
    %494 = vmatpush1.bf16.msra.mxu0 0
    %495 = vmatprep.subr.bf16.mxu0 0
    %496 = vmatpush1.bf16.msra.mxu0 0
    %497 = vmatprep.subr.bf16.mxu0 0
    %498 = vmatpush1.bf16.msra.mxu0 %v478
    %499 = vmatprep.subr.bf16.mxu0 0
    %500 = vmatpush2.bf16.msra.mxu0 0
    %501 = vmatprep.subr.bf16.mxu0 0
    %502 = vmatpush2.bf16.msra.mxu0 0
    %503 = vmatprep.subr.bf16.mxu0 0
    %504 = vmatpush2.bf16.msra.mxu0 0
    %505 = vmatprep.subr.bf16.mxu0 0
    %506 = vmatpush2.bf16.msra.mxu0 0
    %507 = vmatprep.subr.bf16.mxu0 0
    %508 = vmatpush2.bf16.msra.mxu0 0
    %509 = vmatprep.subr.bf16.mxu0 0
    %510 = vmatpush2.bf16.msra.mxu0 0
    %511 = vmatprep.subr.bf16.mxu0 0
    %512 = vmatpush2.bf16.msra.mxu0 0
    %513 = vmatprep.subr.bf16.mxu0 0
    %514 = vmatpush2.bf16.msra.mxu0 0
    %515 = vmatprep.mubr.bf16.mxu0 0
    %516 = vmatmul.mubr.bf16.gmra.mxu0 %v481
    %v517 = vpop.f32.mrf.mxu0
    %v518 = vadd.f32 0.0, %v517
    %v519 = vpop.f32.mrf.mxu0
    %v520 = vpop.f32.mrf.mxu0
    %v521 = vadd.f32 0.0, %v520
    %v522 = vpop.f32.mrf.mxu0
    %523 = vdwg.mxu0
    %524 = vrot.lane.b32.xlu0 %v141, 104
    %v525 = vpop.permute.xlu0 %524
    %526 = vrot.lane.b32.xlu0 %v141, 72
    %v527 = vpop.permute.xlu0 %526
    %v529 = vsel %vm145, %v525, 0
    %v532 = vsel %vm145, %v527, 0
    %534 = vmatprep.subr.bf16.mxu0 0
    %535 = vmatpush1.bf16.xpose.msra.mxu0 0
    %536 = vmatprep.subr.bf16.mxu0 0
    %537 = vmatpush1.bf16.xpose.msra.mxu0 0
    %538 = vmatprep.subr.bf16.mxu0 0
    %539 = vmatpush1.bf16.xpose.msra.mxu0 0
    %540 = vmatprep.subr.bf16.mxu0 0
    %541 = vmatpush1.bf16.xpose.msra.mxu0 0
    %542 = vmatprep.subr.bf16.mxu0 0
    %543 = vmatpush1.bf16.xpose.msra.mxu0 0
    %544 = vmatprep.subr.bf16.mxu0 0
    %545 = vmatpush1.bf16.xpose.msra.mxu0 0
    %546 = vmatprep.subr.bf16.mxu0 0
    %547 = vmatpush1.bf16.xpose.msra.mxu0 0
    %548 = vmatprep.subr.bf16.mxu0 0
    %549 = vmatpush1.bf16.xpose.msra.mxu0 %v532
    %550 = vmatprep.subr.bf16.mxu0 0
    %551 = vmatpush2.bf16.xpose.msra.mxu0 0
    %552 = vmatprep.subr.bf16.mxu0 0
    %553 = vmatpush2.bf16.xpose.msra.mxu0 0
    %554 = vmatprep.subr.bf16.mxu0 0
    %555 = vmatpush2.bf16.xpose.msra.mxu0 0
    %556 = vmatprep.subr.bf16.mxu0 0
    %557 = vmatpush2.bf16.xpose.msra.mxu0 0
    %558 = vmatprep.subr.bf16.mxu0 0
    %559 = vmatpush2.bf16.xpose.msra.mxu0 0
    %560 = vmatprep.subr.bf16.mxu0 0
    %561 = vmatpush2.bf16.xpose.msra.mxu0 0
    %562 = vmatprep.subr.bf16.mxu0 0
    %563 = vmatpush2.bf16.xpose.msra.mxu0 0
    %564 = vmatprep.subr.bf16.mxu0 0
    %565 = vmatpush2.bf16.xpose.msra.mxu0 0
    %566 = vmatprep.mubr.bf16.mxu0 0
    %567 = vmatmul.mubr.bf16.gmra.mxu0 %v529
    %v568 = vpop.f32.mrf.mxu0
    %v569 = vadd.f32 0.0, %v568
    %v570 = vpop.f32.mrf.mxu0
    %v571 = vpop.f32.mrf.mxu0
    %v572 = vadd.f32 0.0, %v571
    %v573 = vpop.f32.mrf.mxu0
    %574 = vdwg.mxu0
    %v575 = vmul.f32 %v569, 0.35355338
    %v576 = vmul.f32 %v572, 0.35355338
    %v577 = vadd.f32 %v575, %v63
    %v578 = vadd.f32 %v576, %v64
    %v579 = vsel %vm197, %v577, -inf
    %580 = vmax.xlane.f32.xlu0 %v579
    %v581 = vpop.xlane.xlu0 %580
    %v582 = vsel %vm197, %v578, -inf
    %583 = vmax.xlane.f32.xlu0 %v582
    %v584 = vpop.xlane.xlu0 %583
    %v585 = vsub.f32 %v577, %v581
    %v586 = vsub.f32 %v578, %v584
    %v587 = vmul.f32 %v585, 1.442695
    %v588 = vpow.pop %v587
    %v589 = vmul.f32 %v586, 1.442695
    %v590 = vpow.pop %v589
    %v591 = vsel %vm197, %v588, 0.0
    %592 = vadd.xlane.f32.xlu0 %v591
    %v593 = vpop.xlane.xlu0 %592
    %v594 = vsel %vm197, %v590, 0.0
    %595 = vadd.xlane.f32.xlu0 %v594
    %v596 = vpop.xlane.xlu0 %595
    %v597 = vrcp.pop %v593
    %v598 = vrcp.pop %v596
    %v599 = vmul.f32 %v588, %v597
    %v600 = vmul.f32 %v590, %v598
    %v601 = vadd.f32 %v474, %v599
    %v602 = vadd.f32 %v475, %v600
    %v603 = vpack.c.bf16 %v600, %v599
    %604 = vrot.lane.b32.xlu0 %v141, 40
    %v605 = vpop.permute.xlu0 %604
    %v608 = vsel %vm197, %v603, 0
    %610 = vmatprep.subr.bf16.mxu0 0
    %611 = vmatpush1.bf16.msra.mxu0 0
    %612 = vmatprep.subr.bf16.mxu0 0
    %613 = vmatpush1.bf16.msra.mxu0 0
    %614 = vmatprep.subr.bf16.mxu0 0
    %615 = vmatpush1.bf16.msra.mxu0 0
    %616 = vmatprep.subr.bf16.mxu0 0
    %617 = vmatpush1.bf16.msra.mxu0 0
    %618 = vmatprep.subr.bf16.mxu0 0
    %619 = vmatpush1.bf16.msra.mxu0 0
    %620 = vmatprep.subr.bf16.mxu0 0
    %621 = vmatpush1.bf16.msra.mxu0 0
    %622 = vmatprep.subr.bf16.mxu0 0
    %623 = vmatpush1.bf16.msra.mxu0 0
    %624 = vmatprep.subr.bf16.mxu0 0
    %625 = vmatpush1.bf16.msra.mxu0 %v605
    %626 = vmatprep.subr.bf16.mxu0 0
    %627 = vmatpush2.bf16.msra.mxu0 0
    %628 = vmatprep.subr.bf16.mxu0 0
    %629 = vmatpush2.bf16.msra.mxu0 0
    %630 = vmatprep.subr.bf16.mxu0 0
    %631 = vmatpush2.bf16.msra.mxu0 0
    %632 = vmatprep.subr.bf16.mxu0 0
    %633 = vmatpush2.bf16.msra.mxu0 0
    %634 = vmatprep.subr.bf16.mxu0 0
    %635 = vmatpush2.bf16.msra.mxu0 0
    %636 = vmatprep.subr.bf16.mxu0 0
    %637 = vmatpush2.bf16.msra.mxu0 0
    %638 = vmatprep.subr.bf16.mxu0 0
    %639 = vmatpush2.bf16.msra.mxu0 0
    %640 = vmatprep.subr.bf16.mxu0 0
    %641 = vmatpush2.bf16.msra.mxu0 0
    %642 = vmatprep.mubr.bf16.mxu0 0
    %643 = vmatmul.mubr.bf16.gmra.mxu0 %v608
    %v644 = vpop.f32.mrf.mxu0
    %v645 = vadd.f32 0.0, %v644
    %v646 = vpop.f32.mrf.mxu0
    %v647 = vpop.f32.mrf.mxu0
    %v648 = vadd.f32 0.0, %v647
    %v649 = vpop.f32.mrf.mxu0
    %650 = vdwg.mxu0
    %653 = vrot.lane.b32.xlu0 %v391, 8
    %v654 = vpop.permute.xlu0 %653
    %655 = vrot.lane.b32.xlu0 %v394, 8
    %v656 = vpop.permute.xlu0 %655
    %661 = vrot.lane.b32.xlu0 %v518, 16
    %v662 = vpop.permute.xlu0 %661
    %663 = vrot.lane.b32.xlu0 %v521, 16
    %v664 = vpop.permute.xlu0 %663
    %669 = vrot.lane.b32.xlu0 %v645, 24
    %v670 = vpop.permute.xlu0 %669
    %671 = vrot.lane.b32.xlu0 %v648, 24
    %v672 = vpop.permute.xlu0 %671
    %v675 = vsel %vm145, %v264, %v654
    %v676 = vsel %vm145, %v267, %v656
    %v677 = vsel %vm197, %v675, %v662
    %v678 = vsel %vm197, %v676, %v664
    %vm679 = vcmask 195584
    %v680 = vsel %vm679, %v677, %v670
    %v681 = vsel %vm679, %v678, %v672
    %v682 = vpack.c.bf16 %v681, %v680
    %v683 = vld [vmem:[%s5] sm:$0xf]
    %v684 = vld [vmem:[%s5 + $0x4] sm:$0xf]
    %v685 = vld [vmem:[%s5 + $0x8] sm:$0xf]
    %v686 = vld [vmem:[%s5 + $0xc] sm:$0xf]
    %v687 = vlaneseq
    %v688 = vshrl.u32 %v687, 7
    %v689 = vsub.s32 0, %v688
    %v690 = vrot.slane %v68, %v689
    %v695 = vunpack.c.l.b16 %v683
    %v696 = vunpack.c.l.b16 %v684
    %v697 = vunpack.c.l.b16 %v685
    %v698 = vunpack.c.l.b16 %v686
    %v699 = vpack.c.b16 %v696, %v695
    %v700 = vpack.c.b16 %v698, %v697
    %v704 = vsel %vm96, %v682, 0
    %706 = vmatprep.subr.bf16.mxu0 0
    %707 = vmatpush1.bf16.msra.mxu0 0
    %708 = vmatprep.subr.bf16.mxu0 0
    %709 = vmatpush1.bf16.msra.mxu0 0
    %710 = vmatprep.subr.bf16.mxu0 0
    %711 = vmatpush1.bf16.msra.mxu0 0
    %712 = vmatprep.subr.bf16.mxu0 0
    %713 = vmatpush1.bf16.msra.mxu0 0
    %714 = vmatprep.subr.bf16.mxu0 0
    %715 = vmatpush1.bf16.msra.mxu0 0
    %716 = vmatprep.subr.bf16.mxu0 0
    %717 = vmatpush1.bf16.msra.mxu0 0
    %718 = vmatprep.subr.bf16.mxu0 0
    %719 = vmatpush1.bf16.msra.mxu0 %v700
    %720 = vmatprep.subr.bf16.mxu0 0
    %721 = vmatpush1.bf16.msra.mxu0 %v699
    %722 = vmatprep.subr.bf16.mxu0 0
    %723 = vmatpush2.bf16.msra.mxu0 0
    %724 = vmatprep.subr.bf16.mxu0 0
    %725 = vmatpush2.bf16.msra.mxu0 0
    %726 = vmatprep.subr.bf16.mxu0 0
    %727 = vmatpush2.bf16.msra.mxu0 0
    %728 = vmatprep.subr.bf16.mxu0 0
    %729 = vmatpush2.bf16.msra.mxu0 0
    %730 = vmatprep.subr.bf16.mxu0 0
    %731 = vmatpush2.bf16.msra.mxu0 0
    %732 = vmatprep.subr.bf16.mxu0 0
    %733 = vmatpush2.bf16.msra.mxu0 0
    %734 = vmatprep.subr.bf16.mxu0 0
    %735 = vmatpush2.bf16.msra.mxu0 0
    %736 = vmatprep.subr.bf16.mxu0 0
    %737 = vmatpush2.bf16.msra.mxu0 0
    %738 = vmatprep.mubr.bf16.mxu0 0
    %739 = vmatmul.mubr.bf16.gmra.mxu0 %v704
    %v740 = vpop.f32.mrf.mxu0
    %v741 = vadd.f32 %v690, %v740
    %v742 = vpop.f32.mrf.mxu0
    %v743 = vpop.f32.mrf.mxu0
    %v744 = vadd.f32 %v690, %v743
    %v745 = vpop.f32.mrf.mxu0
    %746 = vdwg.mxu0
    %v747 = vadd.f32 %v61, %v741
    %v748 = vadd.f32 %v62, %v744
    %v749 = vsel %vm96, %v747, 0.0
    %750 = vadd.xlane.f32.xlu0 %v749
    %v751 = vpop.xlane.xlu0 %750
    %v752 = vsel %vm96, %v748, 0.0
    %753 = vadd.xlane.f32.xlu0 %v752
    %v754 = vpop.xlane.xlu0 %753
    %v755 = vrcp.pop 32.0
    %v756 = vmul.f32 %v751, %v755
    %v757 = vmul.f32 %v754, %v755
    %v758 = vsub.f32 %v747, %v756
    %v759 = vsub.f32 %v748, %v757
    %v760 = vmul.f32 %v758, %v758
    %v761 = vmul.f32 %v759, %v759
    %v762 = vsel %vm96, %v760, 0.0
    %763 = vadd.xlane.f32.xlu0 %v762
    %v764 = vpop.xlane.xlu0 %763
    %v765 = vsel %vm96, %v761, 0.0
    %766 = vadd.xlane.f32.xlu0 %v765
    %v767 = vpop.xlane.xlu0 %766
    %v768 = vmul.f32 %v764, %v755
    %v769 = vmul.f32 %v767, %v755
    %v770 = vadd.f32 %v768, 1e-05
    %v771 = vadd.f32 %v769, 1e-05
    %v772 = vrsqrt.pop %v770
    %v773 = vrsqrt.pop %v771
    %v774 = vmul.f32 %v758, %v772
    %v775 = vmul.f32 %v759, %v773
    %v776 = vlaneseq
    %v777 = vshrl.u32 %v776, 7
    %v778 = vsub.s32 0, %v777
    %v779 = vrot.slane %v69, %v778
    %v780 = vmul.f32 %v774, %v779
    %v781 = vmul.f32 %v775, %v779
    %v782 = vlaneseq
    %v783 = vshrl.u32 %v782, 7
    %v784 = vsub.s32 0, %v783
    %v785 = vrot.slane %v70, %v784
    %v786 = vadd.f32 %v780, %v785
    %v787 = vadd.f32 %v781, %v785
    %v788 = vpack.c.bf16 %v787, %v786
    %v789 = vld [vmem:[%s6] sm:$0xf]
    %v790 = vld [vmem:[%s6 + $0x4] sm:$0xf]
    %v791 = vld [vmem:[%s6 + $0x8] sm:$0xf]
    %v792 = vld [vmem:[%s6 + $0xc] sm:$0xf]
    %v793 = vlaneseq
    %v794 = vshrl.u32 %v793, 7
    %v795 = vsub.s32 0, %v794
    %v796 = vrot.slane %v71, %v795
    %v801 = vunpack.c.l.b16 %v789
    %v802 = vunpack.c.l.b16 %v790
    %v803 = vunpack.c.l.b16 %v791
    %v804 = vunpack.c.l.b16 %v792
    %v805 = vpack.c.b16 %v802, %v801
    %v806 = vpack.c.b16 %v804, %v803
    %v810 = vsel %vm96, %v788, 0
    %812 = vmatprep.subr.bf16.mxu0 0
    %813 = vmatpush1.bf16.msra.mxu0 0
    %814 = vmatprep.subr.bf16.mxu0 0
    %815 = vmatpush1.bf16.msra.mxu0 0
    %816 = vmatprep.subr.bf16.mxu0 0
    %817 = vmatpush1.bf16.msra.mxu0 0
    %818 = vmatprep.subr.bf16.mxu0 0
    %819 = vmatpush1.bf16.msra.mxu0 0
    %820 = vmatprep.subr.bf16.mxu0 0
    %821 = vmatpush1.bf16.msra.mxu0 0
    %822 = vmatprep.subr.bf16.mxu0 0
    %823 = vmatpush1.bf16.msra.mxu0 0
    %824 = vmatprep.subr.bf16.mxu0 0
    %825 = vmatpush1.bf16.msra.mxu0 %v806
    %826 = vmatprep.subr.bf16.mxu0 0
    %827 = vmatpush1.bf16.msra.mxu0 %v805
    %828 = vmatprep.subr.bf16.mxu0 0
    %829 = vmatpush2.bf16.msra.mxu0 0
    %830 = vmatprep.subr.bf16.mxu0 0
    %831 = vmatpush2.bf16.msra.mxu0 0
    %832 = vmatprep.subr.bf16.mxu0 0
    %833 = vmatpush2.bf16.msra.mxu0 0
    %834 = vmatprep.subr.bf16.mxu0 0
    %835 = vmatpush2.bf16.msra.mxu0 0
    %836 = vmatprep.subr.bf16.mxu0 0
    %837 = vmatpush2.bf16.msra.mxu0 0
    %838 = vmatprep.subr.bf16.mxu0 0
    %839 = vmatpush2.bf16.msra.mxu0 0
    %840 = vmatprep.subr.bf16.mxu0 0
    %841 = vmatpush2.bf16.msra.mxu0 0
    %842 = vmatprep.subr.bf16.mxu0 0
    %843 = vmatpush2.bf16.msra.mxu0 0
    %844 = vmatprep.mubr.bf16.mxu0 0
    %845 = vmatmul.mubr.bf16.gmra.mxu0 %v810
    %v846 = vpop.f32.mrf.mxu0
    %v847 = vadd.f32 %v796, %v846
    %v848 = vpop.f32.mrf.mxu0
    %v849 = vpop.f32.mrf.mxu0
    %v850 = vadd.f32 %v796, %v849
    %v851 = vpop.f32.mrf.mxu0
    %852 = vdwg.mxu0
    %v853 = vmul.f32 %v847, 0.5
    %v854 = vmul.f32 %v850, 0.5
    %v855 = vmul.f32 %v847, 0.044715
    %v856 = vmul.f32 %v850, 0.044715
    %v857 = vmul.f32 %v855, %v847
    %v858 = vmul.f32 %v856, %v850
    %v859 = vmul.f32 %v857, %v847
    %v860 = vmul.f32 %v858, %v850
    %v861 = vadd.f32 %v847, %v859
    %v862 = vadd.f32 %v850, %v860
    %v863 = vmul.f32 %v861, 0.7978846
    %v864 = vmul.f32 %v862, 0.7978846
    %v865 = vtanh.pop %v863
    %v866 = vtanh.pop %v864
    %v867 = vadd.f32 %v865, 1.0
    %v868 = vadd.f32 %v866, 1.0
    %v869 = vmul.f32 %v853, %v867
    %v870 = vmul.f32 %v854, %v868
    %v871 = vpack.c.bf16 %v870, %v869
    %v872 = vld [vmem:[%s7] sm:$0xf]
    %v873 = vld [vmem:[%s7 + $0x4] sm:$0xf]
    %v874 = vld [vmem:[%s7 + $0x8] sm:$0xf]
    %v875 = vld [vmem:[%s7 + $0xc] sm:$0xf]
    %v876 = vld [vmem:[%s7 + $0x10] sm:$0xf]
    %v877 = vld [vmem:[%s7 + $0x14] sm:$0xf]
    %v878 = vld [vmem:[%s7 + $0x18] sm:$0xf]
    %v879 = vld [vmem:[%s7 + $0x1c] sm:$0xf]
    %v880 = vld [vmem:[%s7 + $0x20] sm:$0xf]
    %v881 = vld [vmem:[%s7 + $0x24] sm:$0xf]
    %v882 = vld [vmem:[%s7 + $0x28] sm:$0xf]
    %v883 = vld [vmem:[%s7 + $0x2c] sm:$0xf]
    %v884 = vld [vmem:[%s7 + $0x30] sm:$0xf]
    %v885 = vld [vmem:[%s7 + $0x34] sm:$0xf]
    %v886 = vld [vmem:[%s7 + $0x38] sm:$0xf]
    %v887 = vld [vmem:[%s7 + $0x3c] sm:$0xf]
    %v888 = vlaneseq
    %v889 = vshrl.u32 %v888, 7
    %v890 = vsub.s32 0, %v889
    %v891 = vrot.slane %v72, %v890
    %v908 = vunpack.c.l.b16 %v872
    %v909 = vunpack.c.l.b16 %v873
    %v910 = vunpack.c.l.b16 %v874
    %v911 = vunpack.c.l.b16 %v875
    %v912 = vunpack.c.l.b16 %v876
    %v913 = vunpack.c.l.b16 %v877
    %v914 = vunpack.c.l.b16 %v878
    %v915 = vunpack.c.l.b16 %v879
    %v916 = vunpack.c.l.b16 %v880
    %v917 = vunpack.c.l.b16 %v881
    %v918 = vunpack.c.l.b16 %v882
    %v919 = vunpack.c.l.b16 %v883
    %v920 = vunpack.c.l.b16 %v884
    %v921 = vunpack.c.l.b16 %v885
    %v922 = vunpack.c.l.b16 %v886
    %v923 = vunpack.c.l.b16 %v887
    %v924 = vpack.c.b16 %v909, %v908
    %v925 = vpack.c.b16 %v911, %v910
    %v926 = vpack.c.b16 %v913, %v912
    %v927 = vpack.c.b16 %v915, %v914
    %v928 = vpack.c.b16 %v917, %v916
    %v929 = vpack.c.b16 %v919, %v918
    %v930 = vpack.c.b16 %v921, %v920
    %v931 = vpack.c.b16 %v923, %v922
    %940 = vmatprep.subr.bf16.mxu0 0
    %941 = vmatpush1.bf16.msra.mxu0 %v931
    %942 = vmatprep.subr.bf16.mxu0 0
    %943 = vmatpush1.bf16.msra.mxu0 %v930
    %944 = vmatprep.subr.bf16.mxu0 0
    %945 = vmatpush1.bf16.msra.mxu0 %v929
    %946 = vmatprep.subr.bf16.mxu0 0
    %947 = vmatpush1.bf16.msra.mxu0 %v928
    %948 = vmatprep.subr.bf16.mxu0 0
    %949 = vmatpush1.bf16.msra.mxu0 %v927
    %950 = vmatprep.subr.bf16.mxu0 0
    %951 = vmatpush1.bf16.msra.mxu0 %v926
    %952 = vmatprep.subr.bf16.mxu0 0
    %953 = vmatpush1.bf16.msra.mxu0 %v925
    %954 = vmatprep.subr.bf16.mxu0 0
    %955 = vmatpush1.bf16.msra.mxu0 %v924
    %956 = vmatprep.subr.bf16.mxu0 0
    %957 = vmatpush2.bf16.msra.mxu0 0
    %958 = vmatprep.subr.bf16.mxu0 0
    %959 = vmatpush2.bf16.msra.mxu0 0
    %960 = vmatprep.subr.bf16.mxu0 0
    %961 = vmatpush2.bf16.msra.mxu0 0
    %962 = vmatprep.subr.bf16.mxu0 0
    %963 = vmatpush2.bf16.msra.mxu0 0
    %964 = vmatprep.subr.bf16.mxu0 0
    %965 = vmatpush2.bf16.msra.mxu0 0
    %966 = vmatprep.subr.bf16.mxu0 0
    %967 = vmatpush2.bf16.msra.mxu0 0
    %968 = vmatprep.subr.bf16.mxu0 0
    %969 = vmatpush2.bf16.msra.mxu0 0
    %970 = vmatprep.subr.bf16.mxu0 0
    %971 = vmatpush2.bf16.msra.mxu0 0
    %972 = vmatprep.mubr.bf16.mxu0 0
    %973 = vmatmul.mubr.bf16.gmra.mxu0 %v871
    %v974 = vpop.f32.mrf.mxu0
    %v975 = vadd.f32 %v891, %v974
    %v976 = vpop.f32.mrf.mxu0
    %v977 = vpop.f32.mrf.mxu0
    %v978 = vadd.f32 %v891, %v977
    %v979 = vpop.f32.mrf.mxu0
    %980 = vdwg.mxu0
    %v981 = vadd.f32 %v786, %v975
    %v982 = vadd.f32 %v787, %v978
    %v983 = vsel %vm96, %v981, 0.0
    %984 = vadd.xlane.f32.xlu0 %v983
    %v985 = vpop.xlane.xlu0 %984
    %v986 = vsel %vm96, %v982, 0.0
    %987 = vadd.xlane.f32.xlu0 %v986
    %v988 = vpop.xlane.xlu0 %987
    %v989 = vmul.f32 %v985, %v755
    %v990 = vmul.f32 %v988, %v755
    %v991 = vsub.f32 %v981, %v989
    %v992 = vsub.f32 %v982, %v990
    %v993 = vmul.f32 %v991, %v991
    %v994 = vmul.f32 %v992, %v992
    %v995 = vsel %vm96, %v993, 0.0
    %996 = vadd.xlane.f32.xlu0 %v995
    %v997 = vpop.xlane.xlu0 %996
    %v998 = vsel %vm96, %v994, 0.0
    %999 = vadd.xlane.f32.xlu0 %v998
    %v1000 = vpop.xlane.xlu0 %999
    %v1001 = vmul.f32 %v997, %v755
    %v1002 = vmul.f32 %v1000, %v755
    %v1003 = vadd.f32 %v1001, 1e-05
    %v1004 = vadd.f32 %v1002, 1e-05
    %v1005 = vrsqrt.pop %v1003
    %v1006 = vrsqrt.pop %v1004
    %v1007 = vmul.f32 %v991, %v1005
    %v1008 = vmul.f32 %v992, %v1006
    %v1009 = vlaneseq
    %v1010 = vshrl.u32 %v1009, 7
    %v1011 = vsub.s32 0, %v1010
    %v1012 = vrot.slane %v73, %v1011
    %v1013 = vmul.f32 %v1007, %v1012
    %v1014 = vmul.f32 %v1008, %v1012
    %v1015 = vlaneseq
    %v1016 = vshrl.u32 %v1015, 7
    %v1017 = vsub.s32 0, %v1016
    %v1018 = vrot.slane %v74, %v1017
    %v1019 = vadd.f32 %v1013, %v1018
    %v1020 = vadd.f32 %v1014, %v1018
    %v1021 = vsel %vm96, %v1019, 0.0
    %v1022 = vsel %vm96, %v1020, 0.0
    %1023 = vst [vmem:[#allocation7] sm:$0xff] %v1021
    %1024 = vst [vmem:[#allocation7 + $0x8] sm:$0xff] %v1022
    %v1026 = vsel %vm197, %v65, 0
    %1028 = vmatprep.subr.mxu0 0.0
    %1029 = vmatpush1.msra.mxu0 0.0
    %1030 = vmatprep.subr.mxu0 0.0
    %1031 = vmatpush1.msra.mxu0 0.0
    %1032 = vmatprep.subr.mxu0 0.0
    %1033 = vmatpush1.msra.mxu0 0.0
    %1034 = vmatprep.subr.mxu0 0.0
    %1035 = vmatpush1.msra.mxu0 0.0
    %1036 = vmatprep.subr.mxu0 0.0
    %1037 = vmatpush1.msra.mxu0 0.0
    %1038 = vmatprep.subr.mxu0 0.0
    %1039 = vmatpush1.msra.mxu0 0.0
    %1040 = vmatprep.subr.mxu0 0.0
    %1041 = vmatpush1.msra.mxu0 0.0
    %1042 = vmatprep.subr.mxu0 0.0
    %1043 = vmatpush1.msra.mxu0 0.0
    %1044 = vmatprep.subr.mxu0 0.0
    %1045 = vmatpush1.msra.mxu0 0.0
    %1046 = vmatprep.subr.mxu0 0.0
    %1047 = vmatpush1.msra.mxu0 0.0
    %1048 = vmatprep.subr.mxu0 0.0
    %1049 = vmatpush1.msra.mxu0 0.0
    %1050 = vmatprep.subr.mxu0 0.0
    %1051 = vmatpush1.msra.mxu0 0.0
    %1052 = vmatprep.subr.mxu0 0.0
    %1053 = vmatpush1.msra.mxu0 0.0
    %1054 = vmatprep.subr.mxu0 0.0
    %1055 = vmatpush1.msra.mxu0 0.0
    %1056 = vmatprep.subr.mxu0 0.0
    %1057 = vmatpush1.msra.mxu0 %v1020
    %1058 = vmatprep.subr.mxu0 0.0
    %1059 = vmatpush1.msra.mxu0 %v1019
    %1060 = vmatprep.subr.mxu0 0.0
    %1061 = vmatpush2.msra.mxu0 0.0
    %1062 = vmatprep.subr.mxu0 0.0
    %1063 = vmatpush2.msra.mxu0 0.0
    %1064 = vmatprep.subr.mxu0 0.0
    %1065 = vmatpush2.msra.mxu0 0.0
    %1066 = vmatprep.subr.mxu0 0.0
    %1067 = vmatpush2.msra.mxu0 0.0
    %1068 = vmatprep.subr.mxu0 0.0
    %1069 = vmatpush2.msra.mxu0 0.0
    %1070 = vmatprep.subr.mxu0 0.0
    %1071 = vmatpush2.msra.mxu0 0.0
    %1072 = vmatprep.subr.mxu0 0.0
    %1073 = vmatpush2.msra.mxu0 0.0
    %1074 = vmatprep.subr.mxu0 0.0
    %1075 = vmatpush2.msra.mxu0 0.0
    %1076 = vmatprep.subr.mxu0 0.0
    %1077 = vmatpush2.msra.mxu0 0.0
    %1078 = vmatprep.subr.mxu0 0.0
    %1079 = vmatpush2.msra.mxu0 0.0
    %1080 = vmatprep.subr.mxu0 0.0
    %1081 = vmatpush2.msra.mxu0 0.0
    %1082 = vmatprep.subr.mxu0 0.0
    %1083 = vmatpush2.msra.mxu0 0.0
    %1084 = vmatprep.subr.mxu0 0.0
    %1085 = vmatpush2.msra.mxu0 0.0
    %1086 = vmatprep.subr.mxu0 0.0
    %1087 = vmatpush2.msra.mxu0 0.0
    %1088 = vmatprep.subr.mxu0 0.0
    %1089 = vmatpush2.msra.mxu0 0.0
    %1090 = vmatprep.subr.mxu0 0.0
    %1091 = vmatpush2.msra.mxu0 0.0
    %1092 = vmatprep.mubr.f32.mxu0 0.0
    %1093 = vmatmul.mubr.f32.gmra.mxu0 %v1026
    %v1094 = vpop.f32.mrf.mxu0
    %v1095 = vadd.f32 0.0, %v1094
    %v1096 = vpop.f32.mrf.mxu0
    %1097 = vdwg.mxu0
    %v1098 = vmul.f32 %v601, 0.25
    %v1099 = vmul.f32 %v602, 0.25
    %v1101 = vsel %vm197, %v66, 0
    %1103 = vmatprep.subr.mxu0 0.0
    %1104 = vmatpush1.msra.mxu0 0.0
    %1105 = vmatprep.subr.mxu0 0.0
    %1106 = vmatpush1.msra.mxu0 0.0
    %1107 = vmatprep.subr.mxu0 0.0
    %1108 = vmatpush1.msra.mxu0 0.0
    %1109 = vmatprep.subr.mxu0 0.0
    %1110 = vmatpush1.msra.mxu0 0.0
    %1111 = vmatprep.subr.mxu0 0.0
    %1112 = vmatpush1.msra.mxu0 0.0
    %1113 = vmatprep.subr.mxu0 0.0
    %1114 = vmatpush1.msra.mxu0 0.0
    %1115 = vmatprep.subr.mxu0 0.0
    %1116 = vmatpush1.msra.mxu0 0.0
    %1117 = vmatprep.subr.mxu0 0.0
    %1118 = vmatpush1.msra.mxu0 0.0
    %1119 = vmatprep.subr.mxu0 0.0
    %1120 = vmatpush1.msra.mxu0 0.0
    %1121 = vmatprep.subr.mxu0 0.0
    %1122 = vmatpush1.msra.mxu0 0.0
    %1123 = vmatprep.subr.mxu0 0.0
    %1124 = vmatpush1.msra.mxu0 0.0
    %1125 = vmatprep.subr.mxu0 0.0
    %1126 = vmatpush1.msra.mxu0 0.0
    %1127 = vmatprep.subr.mxu0 0.0
    %1128 = vmatpush1.msra.mxu0 0.0
    %1129 = vmatprep.subr.mxu0 0.0
    %1130 = vmatpush1.msra.mxu0 0.0
    %1131 = vmatprep.subr.mxu0 0.0
    %1132 = vmatpush1.msra.mxu0 %v1099
    %1133 = vmatprep.subr.mxu0 0.0
    %1134 = vmatpush1.msra.mxu0 %v1098
    %1135 = vmatprep.subr.mxu0 0.0
    %1136 = vmatpush2.msra.mxu0 0.0
    %1137 = vmatprep.subr.mxu0 0.0
    %1138 = vmatpush2.msra.mxu0 0.0
    %1139 = vmatprep.subr.mxu0 0.0
    %1140 = vmatpush2.msra.mxu0 0.0
    %1141 = vmatprep.subr.mxu0 0.0
    %1142 = vmatpush2.msra.mxu0 0.0
    %1143 = vmatprep.subr.mxu0 0.0
    %1144 = vmatpush2.msra.mxu0 0.0
    %1145 = vmatprep.subr.mxu0 0.0
    %1146 = vmatpush2.msra.mxu0 0.0
    %1147 = vmatprep.subr.mxu0 0.0
    %1148 = vmatpush2.msra.mxu0 0.0
    %1149 = vmatprep.subr.mxu0 0.0
    %1150 = vmatpush2.msra.mxu0 0.0
    %1151 = vmatprep.subr.mxu0 0.0
    %1152 = vmatpush2.msra.mxu0 0.0
    %1153 = vmatprep.subr.mxu0 0.0
    %1154 = vmatpush2.msra.mxu0 0.0
    %1155 = vmatprep.subr.mxu0 0.0
    %1156 = vmatpush2.msra.mxu0 0.0
    %1157 = vmatprep.subr.mxu0 0.0
    %1158 = vmatpush2.msra.mxu0 0.0
    %1159 = vmatprep.subr.mxu0 0.0
    %1160 = vmatpush2.msra.mxu0 0.0
    %1161 = vmatprep.subr.mxu0 0.0
    %1162 = vmatpush2.msra.mxu0 0.0
    %1163 = vmatprep.subr.mxu0 0.0
    %1164 = vmatpush2.msra.mxu0 0.0
    %1165 = vmatprep.subr.mxu0 0.0
    %1166 = vmatpush2.msra.mxu0 0.0
    %1167 = vmatprep.mubr.f32.mxu0 0.0
    %1168 = vmatmul.mubr.f32.gmra.mxu0 %v1101
    %v1169 = vpop.f32.mrf.mxu0
    %v1170 = vadd.f32 0.0, %v1169
    %v1171 = vpop.f32.mrf.mxu0
    %1172 = vdwg.mxu0
    %1173 = vst [vmem:[#allocation8] sm:$0x3] 0.0
    %vm1174 = vcmask 254976
    %1175 = vst.msk [vmem:[#allocation8] sm:$0x3] %vm1174, %v1095
    %1177 = vrot.lane.b32.xlu0 %v1170, 32
    %v1178 = vpop.permute.xlu0 %1177
    %vm1180 = vcmask 386304
    %1181 = vst.msk [vmem:[#allocation8] sm:$0x3] %vm1180, %v1178
    // Predicated region
    $region46: #{tpu_custom_call.1} parent=1 // pred_check
      _
    $region47: #{tpu_custom_call.1} parent=1 // pred_check_branch
      %1183 = sbr.rel (0) target = $region49
    $region48: #{tpu_custom_call.1} parent=1 // pred_region
      %s1185 = ssub.s32 256, 256
      %1186 = vsyncadd [#allocation4], %s1185
      %s1187 = sshll.u32 [#allocation7], 4
      %s1188 = int_to_ptr.vmem [resolvable:$true] %s1187
      %1193 = dma.vmem_to_hbm [thread:$0]  %s1188, 256, %s9, [#allocation4], 128, 128, 8
    $region49: #{tpu_custom_call.1} parent=1 // pred_fallthru
      _
    // Predicated region
    $region50: #{tpu_custom_call.1} parent=1 // pred_check
      _
    $region51: #{tpu_custom_call.1} parent=1 // pred_check_branch
      %1195 = sbr.rel (0) target = $region53
    $region52: #{tpu_custom_call.1} parent=1 // pred_region
      %s1197 = ssub.s32 32, 32
      %1198 = vsyncadd [#allocation9], %s1197
      %s1200 = sshll.u32 [#allocation8], 4
      %s1201 = int_to_ptr.vmem [resolvable:$true] %s1200
      %1203 = dma.vmem_to_hbm [thread:$0]  %s1201, 32, %s10, [#allocation9]
    $region53: #{tpu_custom_call.1} parent=1 // pred_fallthru
      _
    // Predicated region
    $region54: #{tpu_custom_call.1} parent=1 // pred_check
      _
    $region55: #{tpu_custom_call.1} parent=1 // pred_check_branch
      %1205 = sbr.rel (0) target = $region57
    $region56: #{tpu_custom_call.1} parent=1 // pred_region
      %1206 = dma.done [#allocation4], 256
    $region57: #{tpu_custom_call.1} parent=1 // pred_fallthru
      _
    // Predicated region
    $region58: #{tpu_custom_call.1} parent=1 // pred_check
      _
    $region59: #{tpu_custom_call.1} parent=1 // pred_check_branch
      %1208 = sbr.rel (0) target = $region61
    $region60: #{tpu_custom_call.1} parent=1 // pred_region
      %1209 = dma.done [#allocation9], 32
    $region61: #{tpu_custom_call.1} parent=1 // pred_fallthru
      _
    %1210 = vsyncpa [#allocation3], 1
    %1211 = vsyncpa [#allocation6], 1
    %1212 = vsyncpa [#allocation4], 1
    %1213 = vsyncpa [#allocation9], 1

</llo_original>
